<compile_context>
chip_gen: v7x
topology: tpu7x:2x2x1
jax: 0.10.0
libtpu: 0.0.40
codegen_flags: <defaults>
</compile_context>

<pallas_src>
import functools

import jax
import jax.numpy as jnp
from jax.experimental import pallas as pl
from jax.experimental.pallas import tpu as pltpu


def ssr_kernel(x_ref, wt_ref, bt_ref, wr_ref, br_ref, tanh_ref, relu_ref):
    """x_ref: (TBp, G*8); wt_ref: (G*8, G*2C); wr_ref: (G*8, G*bins*C)."""
    x = x_ref[...]

    # Single MXU contraction per activation group (K = G*8 <= 128).
    yt = jnp.dot(x, wt_ref[...],
                 preferred_element_type=jnp.float32,
                 precision=jax.lax.Precision.HIGHEST) + bt_ref[...]
    yr = jnp.dot(x, wr_ref[...],
                 preferred_element_type=jnp.float32,
                 precision=jax.lax.Precision.HIGHEST) + br_ref[...]

    # tanh only on the shift/scale columns, relu only on the pred columns.
    tanh_ref[...] = jnp.tanh(yt).astype(tanh_ref.dtype)
    relu_ref[...] = jnp.maximum(yr, 0.0).astype(relu_ref.dtype)


def extract_ssr_params(x, params, bins, classes, tb=4096, g=None):
    """x: (B, 8) float32. Returns [pred (B,classes,bins), shift (B,classes), scale (B,classes)]."""
    B = x.shape[0]
    wsh, bsh, wsc, bsc, wp, bp = params

    C = classes
    n_pred = bins * classes
    n_tanh = 2 * C
    n_total = n_tanh + n_pred

    # Lane-packing factor G: pack G batch rows into the lane axis (G*8 <= 128).
    if g is None:
        g = max(1, min(16, 1024 // max(n_total, 1)))
    G = int(g)

    # Exact block-diagonal fusion of the three Linear layers.
    w_t = jnp.zeros((8, n_tanh), jnp.float32)
    w_t = w_t.at[0:2, 0:C].set(wsh)
    w_t = w_t.at[2:4, C:n_tanh].set(wsc)
    w_r = jnp.zeros((8, n_pred), jnp.float32)
    w_r = w_r.at[4:8, :].set(wp)
    b_t = jnp.concatenate([bsh, bsc], axis=1)         # (1, n_tanh)
    b_r = bp                                          # (1, n_pred)

    # G-way block-diagonal replication: lane-group i of x maps to lane-group i
    # of the output, so the packed output IS the flat row-major output.
    eye = jnp.eye(G, dtype=jnp.float32)
    w_t_big = jnp.kron(eye, w_t)                      # (G*8, G*n_tanh)
    w_r_big = jnp.kron(eye, w_r)                      # (G*8, G*n_pred)
    b_t_big = jnp.tile(b_t, (1, G))                   # (1, G*n_tanh)
    b_r_big = jnp.tile(b_r, (1, G))                   # (1, G*n_pred)

    # Batch tiling: tb original rows per grid step, multiple of 8*G sublanes.
    lane_rows = 8 * G
    b_min = ((B + lane_rows - 1) // lane_rows) * lane_rows
    tb = max(lane_rows, min((tb // lane_rows) * lane_rows, b_min))
    # Keep >= 2 grid steps when possible so v7x's second TensorCore gets work.
    if b_min // tb < 2 and b_min >= 2 * lane_rows:
        tb = max(lane_rows, ((b_min // 2) // lane_rows) * lane_rows)
    b_pad = ((b_min + tb - 1) // tb) * tb

    # Pad + free row-major reshape into the packed layout.  (Keep the wrapper
    # under jit so the pad/slice fuse with neighbors; no pad at all when B is
    # already a multiple of 8*G.)
    if b_pad != B:
        x = jnp.pad(x, ((0, b_pad - B), (0, 0)))
    xp = x.reshape(b_pad // G, G * 8)

    Bp = b_pad // G            # packed rows total
    tbp = tb // G              # packed rows per grid step (multiple of 8)
    grid = (Bp // tbp,)

    out_t, out_r = pl.pallas_call(
        ssr_kernel,
        out_shape=(jax.ShapeDtypeStruct((Bp, G * n_tanh), jnp.float32),
                   jax.ShapeDtypeStruct((Bp, G * n_pred), jnp.float32)),
        grid=grid,
        in_specs=[
            pl.BlockSpec((tbp, G * 8), lambda i: (i, 0)),          # x tile, pipelined
            pl.BlockSpec((G * 8, G * n_tanh), lambda i: (0, 0)),   # tanh W, VMEM-resident
            pl.BlockSpec((1, G * n_tanh), lambda i: (0, 0)),       # tanh bias
            pl.BlockSpec((G * 8, G * n_pred), lambda i: (0, 0)),   # relu W, VMEM-resident
            pl.BlockSpec((1, G * n_pred), lambda i: (0, 0)),       # relu bias
        ],
        out_specs=(
            pl.BlockSpec((tbp, G * n_tanh), lambda i: (i, 0)),
            pl.BlockSpec((tbp, G * n_pred), lambda i: (i, 0)),
        ),
        compiler_params=pltpu.CompilerParams(
            dimension_semantics=("parallel",)),
    )(xp, w_t_big, b_t_big, w_r_big, b_r_big)

    # Free row-major unpack + trim batch padding.
    tanh_out = out_t.reshape(b_pad, n_tanh)[:B]
    relu_out = out_r.reshape(b_pad, n_pred)[:B]
    shift = tanh_out[:, :C]
    scale = tanh_out[:, C:]
    pred = relu_out.reshape(B, C, bins)   # row-major, same as torch .view
    return [pred, shift, scale]


def init_params(key, bins, classes):
    """Deterministic parameter init (PyTorch Linear shapes, stored transposed)."""
    k = jax.random.split(key, 6)
    wsh = jax.random.normal(k[0], (2, classes), jnp.float32) * 0.5
    bsh = jax.random.normal(k[1], (1, classes), jnp.float32) * 0.1
    wsc = jax.random.normal(k[2], (2, classes), jnp.float32) * 0.5
    bsc = jax.random.normal(k[3], (1, classes), jnp.float32) * 0.1
    wp = jax.random.normal(k[4], (4, bins * classes), jnp.float32) * 0.5
    bp = jax.random.normal(k[5], (1, bins * classes), jnp.float32) * 0.1
    return (wsh, bsh, wsc, bsc, wp, bp)


def reference(x, params, bins, classes):
    wsh, bsh, wsc, bsc, wp, bp = params
    hp = jax.lax.Precision.HIGHEST
    shift = jnp.tanh(jnp.dot(x[:, 0:2], wsh, precision=hp) + bsh)
    scale = jnp.tanh(jnp.dot(x[:, 2:4], wsc, precision=hp) + bsc)
    pred = jax.nn.relu(jnp.dot(x[:, 4:8], wp, precision=hp) + bp)
    pred = pred.reshape(x.shape[0], classes, bins)
    return [pred, shift, scale]


if __name__ == "__main__":
    bins, classes = 3, 3
    B = 300  # not a multiple of 8*G=128 -> exercises padding + a 3-step batch grid

    key = jax.random.PRNGKey(0)
    kx, kp = jax.random.split(key)
    x = jax.random.normal(kx, (B, 8), jnp.float32)
    params = init_params(kp, bins, classes)

    fn = jax.jit(functools.partial(extract_ssr_params, bins=bins, classes=classes))
    outs = jax.block_until_ready(fn(x, params))

    refs = reference(x, params, bins, classes)
    for o, r in zip(outs, refs):
        assert o.shape == r.shape, (o.shape, r.shape)
        assert jnp.allclose(o, r, atol=3e-5, rtol=3e-5), float(jnp.max(jnp.abs(o - r)))

    print("KERNEL_OK")
</pallas_src>

<mosaic_0001>
module attributes {stable_mosaic.version = 11 : i64} {
  func.func @ssr_kernel(%arg0: i32, %arg1: memref<8x128xf32, #tpu.memory_space<vmem>>, %arg2: memref<128x96xf32, #tpu.memory_space<vmem>>, %arg3: memref<1x96xf32, #tpu.memory_space<vmem>>, %arg4: memref<128x144xf32, #tpu.memory_space<vmem>>, %arg5: memref<1x144xf32, #tpu.memory_space<vmem>>, %arg6: memref<8x96xf32, #tpu.memory_space<vmem>>, %arg7: memref<8x144xf32, #tpu.memory_space<vmem>>) attributes {dimension_semantics = [#tpu.dimension_semantics<parallel>], iteration_bounds = array<i64: 3>, scalar_prefetch = 0 : i64, scratch_operands = 0 : i64, tpu.core_type = #tpu.core_type<tc>, window_params = [{transform_indices = @transform_0, window_bounds = array<i64: 8, 128>}, {pipeline_mode = #tpu.pipeline_mode<synchronous>, transform_indices = @transform_1, window_bounds = array<i64: 128, 96>}, {pipeline_mode = #tpu.pipeline_mode<synchronous>, transform_indices = @transform_2, window_bounds = array<i64: 1, 96>}, {pipeline_mode = #tpu.pipeline_mode<synchronous>, transform_indices = @transform_3, window_bounds = array<i64: 128, 144>}, {pipeline_mode = #tpu.pipeline_mode<synchronous>, transform_indices = @transform_4, window_bounds = array<i64: 1, 144>}, {transform_indices = @transform_5, window_bounds = array<i64: 8, 96>}, {transform_indices = @transform_6, window_bounds = array<i64: 8, 144>}]} {
    %c0 = arith.constant 0 : index
    %c0_0 = arith.constant 0 : index
    %0 = vector.load %arg1[%c0, %c0_0] : memref<8x128xf32, #tpu.memory_space<vmem>>, vector<8x128xf32>
    %c0_1 = arith.constant 0 : index
    %c0_2 = arith.constant 0 : index
    %1 = vector.load %arg2[%c0_1, %c0_2] : memref<128x96xf32, #tpu.memory_space<vmem>>, vector<128x96xf32>
    %cst = arith.constant dense<0.000000e+00> : vector<8x96xf32>
    %2 = tpu.matmul %0, %1, %cst {dimension_numbers = #tpu.dot_dimension_numbers<[1], [0], [0], [1], [0, 0, 1, 1], [], []>, precision = #tpu.contract_precision<fp32>} : vector<8x128xf32>, vector<128x96xf32>, vector<8x96xf32> -> vector<8x96xf32>
    %c0_3 = arith.constant 0 : index
    %c0_4 = arith.constant 0 : index
    %3 = vector.load %arg3[%c0_3, %c0_4] : memref<1x96xf32, #tpu.memory_space<vmem>>, vector<1x96xf32>
    %4 = vector.broadcast %3 : vector<1x96xf32> to vector<8x96xf32>
    %5 = arith.addf %2, %4 : vector<8x96xf32>
    %c0_5 = arith.constant 0 : index
    %c0_6 = arith.constant 0 : index
    %6 = vector.load %arg4[%c0_5, %c0_6] : memref<128x144xf32, #tpu.memory_space<vmem>>, vector<128x144xf32>
    %cst_7 = arith.constant dense<0.000000e+00> : vector<8x144xf32>
    %7 = tpu.matmul %0, %6, %cst_7 {dimension_numbers = #tpu.dot_dimension_numbers<[1], [0], [0], [1], [0, 0, 1, 1], [], []>, precision = #tpu.contract_precision<fp32>} : vector<8x128xf32>, vector<128x144xf32>, vector<8x144xf32> -> vector<8x144xf32>
    %c0_8 = arith.constant 0 : index
    %c0_9 = arith.constant 0 : index
    %8 = vector.load %arg5[%c0_8, %c0_9] : memref<1x144xf32, #tpu.memory_space<vmem>>, vector<1x144xf32>
    %9 = vector.broadcast %8 : vector<1x144xf32> to vector<8x144xf32>
    %10 = arith.addf %7, %9 : vector<8x144xf32>
    %11 = math.tanh %5 : vector<8x96xf32>
    %c0_10 = arith.constant 0 : index
    %c0_11 = arith.constant 0 : index
    %12 = vector.load %arg6[%c0_10, %c0_11] : memref<8x96xf32, #tpu.memory_space<vmem>>, vector<8x96xf32>
    tpu.vector_store %arg6[%c0_10, %c0_11], %11 {strides = array<i32>} : memref<8x96xf32, #tpu.memory_space<vmem>>, vector<8x96xf32>,
    %cst_12 = arith.constant 0.000000e+00 : f32
    %13 = vector.broadcast %cst_12 : f32 to vector<8x144xf32>
    %14 = arith.maximumf %10, %13 : vector<8x144xf32>
    %c0_13 = arith.constant 0 : index
    %c0_14 = arith.constant 0 : index
    %15 = vector.load %arg7[%c0_13, %c0_14] : memref<8x144xf32, #tpu.memory_space<vmem>>, vector<8x144xf32>
    tpu.vector_store %arg7[%c0_13, %c0_14], %14 {strides = array<i32>} : memref<8x144xf32, #tpu.memory_space<vmem>>, vector<8x144xf32>,
    return
  }
  func.func @transform_0(%arg0: i32) -> (i32, i32) {
    %c0_i32 = arith.constant 0 : i32
    %c0_i32_0 = arith.constant 0 : i32
    return %arg0, %c0_i32 : i32, i32
  }
  func.func @transform_1(%arg0: i32) -> (i32, i32) {
    %c0_i32 = arith.constant 0 : i32
    %c0_i32_0 = arith.constant 0 : i32
    %c0_i32_1 = arith.constant 0 : i32
    return %c0_i32, %c0_i32_0 : i32, i32
  }
  func.func @transform_2(%arg0: i32) -> (i32, i32) {
    %c0_i32 = arith.constant 0 : i32
    %c0_i32_0 = arith.constant 0 : i32
    %c0_i32_1 = arith.constant 0 : i32
    return %c0_i32, %c0_i32_0 : i32, i32
  }
  func.func @transform_3(%arg0: i32) -> (i32, i32) {
    %c0_i32 = arith.constant 0 : i32
    %c0_i32_0 = arith.constant 0 : i32
    %c0_i32_1 = arith.constant 0 : i32
    return %c0_i32, %c0_i32_0 : i32, i32
  }
  func.func @transform_4(%arg0: i32) -> (i32, i32) {
    %c0_i32 = arith.constant 0 : i32
    %c0_i32_0 = arith.constant 0 : i32
    %c0_i32_1 = arith.constant 0 : i32
    return %c0_i32, %c0_i32_0 : i32, i32
  }
  func.func @transform_5(%arg0: i32) -> (i32, i32) {
    %c0_i32 = arith.constant 0 : i32
    %c0_i32_0 = arith.constant 0 : i32
    return %arg0, %c0_i32 : i32, i32
  }
  func.func @transform_6(%arg0: i32) -> (i32, i32) {
    %c0_i32 = arith.constant 0 : i32
    %c0_i32_0 = arith.constant 0 : i32
    return %arg0, %c0_i32 : i32, i32
  }
}

</mosaic_0001>

<llo_original>
// kernel: extract_ssr_params.1
$region0: #{extract_ssr_params.1}
  #allocation0 [shape = 'u32[]', space=smem, size = 0x4, offset = 0x4, fixed_abs, tag = 'smem constant byte address 0x4 - core index']
  #allocation1 [shape = 'u32[144,128]{1,0:T(1,128)}', space=vmem, size = 0x12000, scoped, tag = 'internal scratch']
  %s0 = inlined_call_operand.vmem [shape: f32[24,128], index: 0, kind: input, shape index: {}]
  %s1 = inlined_call_operand.vmem [shape: f32[128,96], index: 1, kind: input, shape index: {}]
  %s2 = inlined_call_operand.vmem [shape: f32[1,96], index: 2, kind: input, shape index: {}]
  %s3 = inlined_call_operand.vmem [shape: f32[128,144], index: 3, kind: input, shape index: {}]
  %s4 = inlined_call_operand.vmem [shape: f32[1,144], index: 4, kind: input, shape index: {}]
  %s5 = inlined_call_operand.vmem [shape: f32[24,96], index: 5, kind: output, shape index: {0}]
  %s6 = inlined_call_operand.vmem [shape: f32[24,144], index: 6, kind: output, shape index: {1}]
  %7 = xla_tuple %s5, %s6
  %s8 = sld [smem:[#allocation0]]
  $region61: #{extract_ssr_params.1} parent=0
    _
  %s10 = ssub.s32 1, %s8
  %s11 = scalar_select 0, %s10, %s8
  loop: start=0, step=1, limit=5
  $region2: #{extract_ssr_params.1} parent=0 // loop_pre_header
    _
  $region3: #{extract_ssr_params.1} parent=0 // loop_header
    %s13 = sphi 0, %s17
    %p14 = scmp.ge.s32.totalorder %s13, 5
    %s23 = sphi 0, %s25
    %s26 = sphi 0, %s23
    %s27 = sphi 0, %s26
    %s43 = sphi 0, %s27
    %s47 = sphi 0, %s47
    %s49 = sphi 0, %s47
    %s50 = sphi 0, %s49
    %s64 = sphi 0, %s50
    %s68 = sphi 0, %s68
    %s70 = sphi 0, %s68
    %s71 = sphi 0, %s70
    %s85 = sphi 0, %s71
    %s89 = sphi 0, %s89
    %s91 = sphi 0, %s89
    %s92 = sphi 0, %s91
    %s106 = sphi 0, %s92
    %s110 = sphi 0, %s110
    %s112 = sphi 0, %s110
    %s113 = sphi 0, %s112
    %s127 = sphi 0, %s113
    %s133 = sphi 0, %s135
    %s136 = sphi 0, %s133
    %s137 = sphi 0, %s136
    %s153 = sphi 0, %s137
    %s159 = sphi 0, %s161
    %s162 = sphi 0, %s159
    %s163 = sphi 0, %s162
    %s179 = sphi 0, %s163
  $region4: #{extract_ssr_params.1} parent=0 // loop_header_branch
    %16 = sbr.rel (%p14) target = $region8
  $region5: #{extract_ssr_params.1} parent=0 // loop_body
    %s18 = ssub.s32 %s13, 1
    %s19 = ssub.s32 %s13, 2
    %s20 = sadd.s32 %s13, 1
    %s21 = ssub.s32 %s13, %s20
    %p22 = scmp.eq.s32.totalorder %s21, 0
    %s24 = sadd.s32 %s23, 1
    %s25 = scalar_select %p22, %s23, %s24
    %p28 = pneg %p22
    %p29 = scmp.eq.s32.totalorder %s13, 2
    %p30 = por %p28, %p29
    %p31 = scmp.ne.s32.totalorder %s23, %s26
    %p32 = scmp.eq.s32.totalorder %s13, 0
    %p33 = por %p31, %p32
    %p34 = scmp.ne.s32.totalorder %s23, %s26
    %p35 = scmp.eq.s32.totalorder %s18, 2
    %p36 = por %p34, %p35
    %p37 = scmp.ne.s32.totalorder %s26, %s27
    %p38 = scmp.eq.s32.totalorder %s18, 0
    %p39 = por %p37, %p38
    %p40 = scmp.ne.s32.totalorder %s26, %s27
    %p41 = scmp.eq.s32.totalorder %s19, 2
    %p42 = por %p40, %p41
    %p44 = scmp.ne.s32.totalorder %s27, %s43
    %p45 = scmp.eq.s32.totalorder %s19, 0
    %p46 = por %p44, %p45
    %s48 = sadd.s32 %s47, 1
    %p51 = scmp.eq.s32.totalorder %s13, 2
    %p52 = scmp.ne.s32.totalorder %s47, %s49
    %p53 = scmp.eq.s32.totalorder %s13, 0
    %p54 = por %p52, %p53
    %p55 = scmp.ne.s32.totalorder %s47, %s49
    %p56 = scmp.eq.s32.totalorder %s18, 2
    %p57 = por %p55, %p56
    %p58 = scmp.ne.s32.totalorder %s49, %s50
    %p59 = scmp.eq.s32.totalorder %s18, 0
    %p60 = por %p58, %p59
    %p61 = scmp.ne.s32.totalorder %s49, %s50
    %p62 = scmp.eq.s32.totalorder %s19, 2
    %p63 = por %p61, %p62
    %p65 = scmp.ne.s32.totalorder %s50, %s64
    %p66 = scmp.eq.s32.totalorder %s19, 0
    %p67 = por %p65, %p66
    %s69 = sadd.s32 %s68, 1
    %p72 = scmp.eq.s32.totalorder %s13, 2
    %p73 = scmp.ne.s32.totalorder %s68, %s70
    %p74 = scmp.eq.s32.totalorder %s13, 0
    %p75 = por %p73, %p74
    %p76 = scmp.ne.s32.totalorder %s68, %s70
    %p77 = scmp.eq.s32.totalorder %s18, 2
    %p78 = por %p76, %p77
    %p79 = scmp.ne.s32.totalorder %s70, %s71
    %p80 = scmp.eq.s32.totalorder %s18, 0
    %p81 = por %p79, %p80
    %p82 = scmp.ne.s32.totalorder %s70, %s71
    %p83 = scmp.eq.s32.totalorder %s19, 2
    %p84 = por %p82, %p83
    %p86 = scmp.ne.s32.totalorder %s71, %s85
    %p87 = scmp.eq.s32.totalorder %s19, 0
    %p88 = por %p86, %p87
    %s90 = sadd.s32 %s89, 1
    %p93 = scmp.eq.s32.totalorder %s13, 2
    %p94 = scmp.ne.s32.totalorder %s89, %s91
    %p95 = scmp.eq.s32.totalorder %s13, 0
    %p96 = por %p94, %p95
    %p97 = scmp.ne.s32.totalorder %s89, %s91
    %p98 = scmp.eq.s32.totalorder %s18, 2
    %p99 = por %p97, %p98
    %p100 = scmp.ne.s32.totalorder %s91, %s92
    %p101 = scmp.eq.s32.totalorder %s18, 0
    %p102 = por %p100, %p101
    %p103 = scmp.ne.s32.totalorder %s91, %s92
    %p104 = scmp.eq.s32.totalorder %s19, 2
    %p105 = por %p103, %p104
    %p107 = scmp.ne.s32.totalorder %s92, %s106
    %p108 = scmp.eq.s32.totalorder %s19, 0
    %p109 = por %p107, %p108
    %s111 = sadd.s32 %s110, 1
    %p114 = scmp.eq.s32.totalorder %s13, 2
    %p115 = scmp.ne.s32.totalorder %s110, %s112
    %p116 = scmp.eq.s32.totalorder %s13, 0
    %p117 = por %p115, %p116
    %p118 = scmp.ne.s32.totalorder %s110, %s112
    %p119 = scmp.eq.s32.totalorder %s18, 2
    %p120 = por %p118, %p119
    %p121 = scmp.ne.s32.totalorder %s112, %s113
    %p122 = scmp.eq.s32.totalorder %s18, 0
    %p123 = por %p121, %p122
    %p124 = scmp.ne.s32.totalorder %s112, %s113
    %p125 = scmp.eq.s32.totalorder %s19, 2
    %p126 = por %p124, %p125
    %p128 = scmp.ne.s32.totalorder %s113, %s127
    %p129 = scmp.eq.s32.totalorder %s19, 0
    %p130 = por %p128, %p129
    %s131 = ssub.s32 %s13, %s20
    %p132 = scmp.eq.s32.totalorder %s131, 0
    %s134 = sadd.s32 %s133, 1
    %s135 = scalar_select %p132, %s133, %s134
    %p138 = pneg %p132
    %p139 = scmp.eq.s32.totalorder %s13, 2
    %p140 = por %p138, %p139
    %p141 = scmp.ne.s32.totalorder %s133, %s136
    %p142 = scmp.eq.s32.totalorder %s13, 0
    %p143 = por %p141, %p142
    %p144 = scmp.ne.s32.totalorder %s133, %s136
    %p145 = scmp.eq.s32.totalorder %s18, 2
    %p146 = por %p144, %p145
    %p147 = scmp.ne.s32.totalorder %s136, %s137
    %p148 = scmp.eq.s32.totalorder %s18, 0
    %p149 = por %p147, %p148
    %p150 = scmp.ne.s32.totalorder %s136, %s137
    %p151 = scmp.eq.s32.totalorder %s19, 2
    %p152 = por %p150, %p151
    %p154 = scmp.ne.s32.totalorder %s137, %s153
    %p155 = scmp.eq.s32.totalorder %s19, 0
    %p156 = por %p154, %p155
    %s157 = ssub.s32 %s13, %s20
    %p158 = scmp.eq.s32.totalorder %s157, 0
    %s160 = sadd.s32 %s159, 1
    %s161 = scalar_select %p158, %s159, %s160
    %p164 = pneg %p158
    %p165 = scmp.eq.s32.totalorder %s13, 2
    %p166 = por %p164, %p165
    %p167 = scmp.ne.s32.totalorder %s159, %s162
    %p168 = scmp.eq.s32.totalorder %s13, 0
    %p169 = por %p167, %p168
    %p170 = scmp.ne.s32.totalorder %s159, %s162
    %p171 = scmp.eq.s32.totalorder %s18, 2
    %p172 = por %p170, %p171
    %p173 = scmp.ne.s32.totalorder %s162, %s163
    %p174 = scmp.eq.s32.totalorder %s18, 0
    %p175 = por %p173, %p174
    %p176 = scmp.ne.s32.totalorder %s162, %s163
    %p177 = scmp.eq.s32.totalorder %s19, 2
    %p178 = por %p176, %p177
    %p180 = scmp.ne.s32.totalorder %s163, %s179
    %p181 = scmp.eq.s32.totalorder %s19, 0
    %p182 = por %p180, %p181
    %p183 = scmp.le.s32.totalorder 1, %s13
    %p184 = scmp.lt.s32.totalorder %s13, 4
    %p185 = pnand %p183, %p184
    %p186 = pneg %p185
    // Predicated region
    $region9: #{extract_ssr_params.1} parent=5 // pred_check
      _
    $region10: #{extract_ssr_params.1} parent=5 // pred_check_branch
      %188 = sbr.rel (%p185) target = $region12
    $region11: #{extract_ssr_params.1} parent=5 // pred_region
      %s189 = ssub.s32 %s13, 1
      // Predicated region
      $region13: #{extract_ssr_params.1} parent=11 // pred_check
        %p190 = pneg %p60
      $region14: #{extract_ssr_params.1} parent=11 // pred_check_branch
        %192 = sbr.rel (%p190) target = $region16
      $region15: #{extract_ssr_params.1} parent=11 // pred_region
        _
      $region16: #{extract_ssr_params.1} parent=11 // pred_fallthru
        _
      // Predicated region
      $region17: #{extract_ssr_params.1} parent=11 // pred_check
        %p193 = pneg %p81
      $region18: #{extract_ssr_params.1} parent=11 // pred_check_branch
        %195 = sbr.rel (%p193) target = $region20
      $region19: #{extract_ssr_params.1} parent=11 // pred_region
        _
      $region20: #{extract_ssr_params.1} parent=11 // pred_fallthru
        _
      // Predicated region
      $region21: #{extract_ssr_params.1} parent=11 // pred_check
        %p196 = pneg %p102
      $region22: #{extract_ssr_params.1} parent=11 // pred_check_branch
        %198 = sbr.rel (%p196) target = $region24
      $region23: #{extract_ssr_params.1} parent=11 // pred_region
        _
      $region24: #{extract_ssr_params.1} parent=11 // pred_fallthru
        _
      // Predicated region
      $region25: #{extract_ssr_params.1} parent=11 // pred_check
        %p199 = pneg %p123
      $region26: #{extract_ssr_params.1} parent=11 // pred_check_branch
        %201 = sbr.rel (%p199) target = $region28
      $region27: #{extract_ssr_params.1} parent=11 // pred_region
        _
      $region28: #{extract_ssr_params.1} parent=11 // pred_fallthru
        _
    $region12: #{extract_ssr_params.1} parent=5 // pred_fallthru
      _
    %p202 = scmp.lt.s32.totalorder %s13, 3
    // Predicated region
    $region29: #{extract_ssr_params.1} parent=5 // pred_check
      %p203 = pneg %p202
    $region30: #{extract_ssr_params.1} parent=5 // pred_check_branch
      %205 = sbr.rel (%p203) target = $region32
    $region31: #{extract_ssr_params.1} parent=5 // pred_region
      // Predicated region
      $region33: #{extract_ssr_params.1} parent=31 // pred_check
        %p206 = pneg %p33
      $region34: #{extract_ssr_params.1} parent=31 // pred_check_branch
        %208 = sbr.rel (%p206) target = $region36
      $region35: #{extract_ssr_params.1} parent=31 // pred_region
        %p209 = scmp.lt.s32.totalorder %s13, 2
        %s210 = scalar_select %p209, %s13, 2
        %s211 = smul.addr %s210, 8
        %s212 = scalar_lea.vmem %s0, %s211
      $region36: #{extract_ssr_params.1} parent=31 // pred_fallthru
        _
    $region32: #{extract_ssr_params.1} parent=5 // pred_fallthru
      _
    %p213 = scmp.le.s32.totalorder 1, %s13
    %p214 = scmp.lt.s32.totalorder %s13, 4
    %p215 = pnand %p213, %p214
    %p216 = pneg %p215
    // Predicated region
    $region37: #{extract_ssr_params.1} parent=5 // pred_check
      _
    $region38: #{extract_ssr_params.1} parent=5 // pred_check_branch
      %218 = sbr.rel (%p215) target = $region40
    $region39: #{extract_ssr_params.1} parent=5 // pred_region
      %s219 = ssub.s32 %s13, 1
      %p220 = scmp.lt.s32.totalorder %s18, 2
      %s221 = scalar_select %p220, %s18, 2
      %s222 = smul.addr %s221, 8
      %s223 = scalar_lea.vmem %s0, %s222
      %p224 = pneg %p39
      %p225 = pneg %p36
      %p226 = pneg %p60
      %p227 = pneg %p57
      %p228 = pneg %p81
      %p229 = pneg %p78
      %p230 = pneg %p102
      %p231 = pneg %p99
      %p232 = pneg %p123
      %p233 = pneg %p120
      %p234 = pneg %p149
      %p235 = pneg %p146
      %p236 = scmp.lt.s32.totalorder %s18, 2
      %s237 = scalar_select %p236, %s18, 2
      %s238 = smul.addr %s237, 8
      %s239 = scalar_lea.vmem %s5, %s238
      %p240 = pneg %p175
      %p241 = pneg %p172
      %p242 = scmp.lt.s32.totalorder %s18, 2
      %s243 = scalar_select %p242, %s18, 2
      %s244 = smul.addr %s243, 2
      %s245 = smul.addr %s244, 8
      %s246 = scalar_lea.vmem %s6, %s245
      %p247 = scmp.lt.s32.totalorder %s18, 2
      %s248 = scalar_select %p247, %s18, 2
      %s249 = smul.addr %s248, 8
      %s250 = scalar_lea.vmem %s0, %s249
      %p251 = scmp.lt.s32.totalorder %s18, 2
      %s252 = scalar_select %p251, %s18, 2
      %s253 = smul.addr %s252, 8
      %s254 = scalar_lea.vmem %s5, %s253
      %p255 = scmp.lt.s32.totalorder %s18, 2
      %s256 = scalar_select %p255, %s18, 2
      %s257 = smul.addr %s256, 2
      %s258 = smul.addr %s257, 8
      %s259 = scalar_lea.vmem %s6, %s258
      %v260 = vld [vmem:[%s250] sm:$0xff]
      %v261 = vld [vmem:[%s1] sm:$0xff]
      %v262 = vld [vmem:[%s1 + $0x8] sm:$0xff]
      %v263 = vld [vmem:[%s1 + $0x10] sm:$0xff]
      %v264 = vld [vmem:[%s1 + $0x18] sm:$0xff]
      %v265 = vld [vmem:[%s1 + $0x20] sm:$0xff]
      %v266 = vld [vmem:[%s1 + $0x28] sm:$0xff]
      %v267 = vld [vmem:[%s1 + $0x30] sm:$0xff]
      %v268 = vld [vmem:[%s1 + $0x38] sm:$0xff]
      %v269 = vld [vmem:[%s1 + $0x40] sm:$0xff]
      %v270 = vld [vmem:[%s1 + $0x48] sm:$0xff]
      %v271 = vld [vmem:[%s1 + $0x50] sm:$0xff]
      %v272 = vld [vmem:[%s1 + $0x58] sm:$0xff]
      %v273 = vld [vmem:[%s1 + $0x60] sm:$0xff]
      %v274 = vld [vmem:[%s1 + $0x68] sm:$0xff]
      %v275 = vld [vmem:[%s1 + $0x70] sm:$0xff]
      %v276 = vld [vmem:[%s1 + $0x78] sm:$0xff]
      %v277 = vld [vmem:[%s2] sm:$0x1]
      %v279 = vlaneseq
      %v280 = vshrl.u32 %v279, 7
      %v281 = vsub.s32 0, %v280
      %v282 = vrot.slane %v277, %v281
      %284 = vmatprep.subr.mxu0 0.0
      %v285 = vand.u32 %v261, 4294901760
      %286 = vmatpush1.msra.mxu0 %v285
      %287 = vmatprep.subr.mxu0 0.0
      %v288 = vand.u32 %v262, 4294901760
      %289 = vmatpush1.msra.mxu0 %v288
      %290 = vmatprep.subr.mxu0 0.0
      %v291 = vand.u32 %v263, 4294901760
      %292 = vmatpush1.msra.mxu0 %v291
      %293 = vmatprep.subr.mxu0 0.0
      %v294 = vand.u32 %v264, 4294901760
      %295 = vmatpush1.msra.mxu0 %v294
      %296 = vmatprep.subr.mxu0 0.0
      %v297 = vand.u32 %v265, 4294901760
      %298 = vmatpush1.msra.mxu0 %v297
      %299 = vmatprep.subr.mxu0 0.0
      %v300 = vand.u32 %v266, 4294901760
      %301 = vmatpush1.msra.mxu0 %v300
      %302 = vmatprep.subr.mxu0 0.0
      %v303 = vand.u32 %v267, 4294901760
      %304 = vmatpush1.msra.mxu0 %v303
      %305 = vmatprep.subr.mxu0 0.0
      %v306 = vand.u32 %v268, 4294901760
      %307 = vmatpush1.msra.mxu0 %v306
      %308 = vmatprep.subr.mxu0 0.0
      %v309 = vand.u32 %v269, 4294901760
      %310 = vmatpush1.msra.mxu0 %v309
      %311 = vmatprep.subr.mxu0 0.0
      %v312 = vand.u32 %v270, 4294901760
      %313 = vmatpush1.msra.mxu0 %v312
      %314 = vmatprep.subr.mxu0 0.0
      %v315 = vand.u32 %v271, 4294901760
      %316 = vmatpush1.msra.mxu0 %v315
      %317 = vmatprep.subr.mxu0 0.0
      %v318 = vand.u32 %v272, 4294901760
      %319 = vmatpush1.msra.mxu0 %v318
      %320 = vmatprep.subr.mxu0 0.0
      %v321 = vand.u32 %v273, 4294901760
      %322 = vmatpush1.msra.mxu0 %v321
      %323 = vmatprep.subr.mxu0 0.0
      %v324 = vand.u32 %v274, 4294901760
      %325 = vmatpush1.msra.mxu0 %v324
      %326 = vmatprep.subr.mxu0 0.0
      %v327 = vand.u32 %v275, 4294901760
      %328 = vmatpush1.msra.mxu0 %v327
      %329 = vmatprep.subr.mxu0 0.0
      %v330 = vand.u32 %v276, 4294901760
      %331 = vmatpush1.msra.mxu0 %v330
      %332 = vmatprep.subr.mxu0 0.0
      %333 = vmatpush1.msra.mxu0 0.0
      %334 = vmatprep.subr.mxu0 0.0
      %335 = vmatpush1.msra.mxu0 0.0
      %336 = vmatprep.subr.mxu0 0.0
      %337 = vmatpush1.msra.mxu0 0.0
      %338 = vmatprep.subr.mxu0 0.0
      %339 = vmatpush1.msra.mxu0 0.0
      %340 = vmatprep.subr.mxu0 0.0
      %341 = vmatpush1.msra.mxu0 0.0
      %342 = vmatprep.subr.mxu0 0.0
      %343 = vmatpush1.msra.mxu0 0.0
      %344 = vmatprep.subr.mxu0 0.0
      %345 = vmatpush1.msra.mxu0 0.0
      %346 = vmatprep.subr.mxu0 0.0
      %347 = vmatpush1.msra.mxu0 0.0
      %348 = vmatprep.subr.mxu0 0.0
      %349 = vmatpush1.msra.mxu0 0.0
      %350 = vmatprep.subr.mxu0 0.0
      %351 = vmatpush1.msra.mxu0 0.0
      %352 = vmatprep.subr.mxu0 0.0
      %353 = vmatpush1.msra.mxu0 0.0
      %354 = vmatprep.subr.mxu0 0.0
      %355 = vmatpush1.msra.mxu0 0.0
      %356 = vmatprep.subr.mxu0 0.0
      %357 = vmatpush1.msra.mxu0 0.0
      %358 = vmatprep.subr.mxu0 0.0
      %359 = vmatpush1.msra.mxu0 0.0
      %360 = vmatprep.subr.mxu0 0.0
      %361 = vmatpush1.msra.mxu0 0.0
      %362 = vmatprep.subr.mxu0 0.0
      %363 = vmatpush1.msra.mxu0 0.0
      %364 = vmatprep.mubr.f32.mxu0 0.0
      %v365 = vand.u32 %v260, 4294901760
      %v366 = vsub.f32 %v260, %v365
      %v367 = vand.u32 %v366, 4294901760
      %v368 = vsub.f32 %v366, %v367
      %v369 = vand.u32 %v368, 4294901760
      %370 = vmatmul.mubr.f32.gmra.mrb[0].mxu0 %v369
      %v371 = vpop.f32.mrb[0].mxu0
      %v372 = vadd.f32 %v282, %v371
      %v373 = vpop.f32.mrb[0].mxu0
      %374 = vdwg.mxu0
      %375 = vmatprep.subr.mxu0 0.0
      %v376 = vand.u32 %v261, 4294901760
      %v377 = vsub.f32 %v261, %v376
      %v378 = vand.u32 %v377, 4294901760
      %v379 = vsub.f32 %v377, %v378
      %v380 = vand.u32 %v379, 4294901760
      %381 = vmatpush1.msra.mxu0 %v380
      %382 = vmatprep.subr.mxu0 0.0
      %v383 = vand.u32 %v262, 4294901760
      %v384 = vsub.f32 %v262, %v383
      %v385 = vand.u32 %v384, 4294901760
      %v386 = vsub.f32 %v384, %v385
      %v387 = vand.u32 %v386, 4294901760
      %388 = vmatpush1.msra.mxu0 %v387
      %389 = vmatprep.subr.mxu0 0.0
      %v390 = vand.u32 %v263, 4294901760
      %v391 = vsub.f32 %v263, %v390
      %v392 = vand.u32 %v391, 4294901760
      %v393 = vsub.f32 %v391, %v392
      %v394 = vand.u32 %v393, 4294901760
      %395 = vmatpush1.msra.mxu0 %v394
      %396 = vmatprep.subr.mxu0 0.0
      %v397 = vand.u32 %v264, 4294901760
      %v398 = vsub.f32 %v264, %v397
      %v399 = vand.u32 %v398, 4294901760
      %v400 = vsub.f32 %v398, %v399
      %v401 = vand.u32 %v400, 4294901760
      %402 = vmatpush1.msra.mxu0 %v401
      %403 = vmatprep.subr.mxu0 0.0
      %v404 = vand.u32 %v265, 4294901760
      %v405 = vsub.f32 %v265, %v404
      %v406 = vand.u32 %v405, 4294901760
      %v407 = vsub.f32 %v405, %v406
      %v408 = vand.u32 %v407, 4294901760
      %409 = vmatpush1.msra.mxu0 %v408
      %410 = vmatprep.subr.mxu0 0.0
      %v411 = vand.u32 %v266, 4294901760
      %v412 = vsub.f32 %v266, %v411
      %v413 = vand.u32 %v412, 4294901760
      %v414 = vsub.f32 %v412, %v413
      %v415 = vand.u32 %v414, 4294901760
      %416 = vmatpush1.msra.mxu0 %v415
      %417 = vmatprep.subr.mxu0 0.0
      %v418 = vand.u32 %v267, 4294901760
      %v419 = vsub.f32 %v267, %v418
      %v420 = vand.u32 %v419, 4294901760
      %v421 = vsub.f32 %v419, %v420
      %v422 = vand.u32 %v421, 4294901760
      %423 = vmatpush1.msra.mxu0 %v422
      %424 = vmatprep.subr.mxu0 0.0
      %v425 = vand.u32 %v268, 4294901760
      %v426 = vsub.f32 %v268, %v425
      %v427 = vand.u32 %v426, 4294901760
      %v428 = vsub.f32 %v426, %v427
      %v429 = vand.u32 %v428, 4294901760
      %430 = vmatpush1.msra.mxu0 %v429
      %431 = vmatprep.subr.mxu0 0.0
      %v432 = vand.u32 %v269, 4294901760
      %v433 = vsub.f32 %v269, %v432
      %v434 = vand.u32 %v433, 4294901760
      %v435 = vsub.f32 %v433, %v434
      %v436 = vand.u32 %v435, 4294901760
      %437 = vmatpush1.msra.mxu0 %v436
      %438 = vmatprep.subr.mxu0 0.0
      %v439 = vand.u32 %v270, 4294901760
      %v440 = vsub.f32 %v270, %v439
      %v441 = vand.u32 %v440, 4294901760
      %v442 = vsub.f32 %v440, %v441
      %v443 = vand.u32 %v442, 4294901760
      %444 = vmatpush1.msra.mxu0 %v443
      %445 = vmatprep.subr.mxu0 0.0
      %v446 = vand.u32 %v271, 4294901760
      %v447 = vsub.f32 %v271, %v446
      %v448 = vand.u32 %v447, 4294901760
      %v449 = vsub.f32 %v447, %v448
      %v450 = vand.u32 %v449, 4294901760
      %451 = vmatpush1.msra.mxu0 %v450
      %452 = vmatprep.subr.mxu0 0.0
      %v453 = vand.u32 %v272, 4294901760
      %v454 = vsub.f32 %v272, %v453
      %v455 = vand.u32 %v454, 4294901760
      %v456 = vsub.f32 %v454, %v455
      %v457 = vand.u32 %v456, 4294901760
      %458 = vmatpush1.msra.mxu0 %v457
      %459 = vmatprep.subr.mxu0 0.0
      %v460 = vand.u32 %v273, 4294901760
      %v461 = vsub.f32 %v273, %v460
      %v462 = vand.u32 %v461, 4294901760
      %v463 = vsub.f32 %v461, %v462
      %v464 = vand.u32 %v463, 4294901760
      %465 = vmatpush1.msra.mxu0 %v464
      %466 = vmatprep.subr.mxu0 0.0
      %v467 = vand.u32 %v274, 4294901760
      %v468 = vsub.f32 %v274, %v467
      %v469 = vand.u32 %v468, 4294901760
      %v470 = vsub.f32 %v468, %v469
      %v471 = vand.u32 %v470, 4294901760
      %472 = vmatpush1.msra.mxu0 %v471
      %473 = vmatprep.subr.mxu0 0.0
      %v474 = vand.u32 %v275, 4294901760
      %v475 = vsub.f32 %v275, %v474
      %v476 = vand.u32 %v475, 4294901760
      %v477 = vsub.f32 %v475, %v476
      %v478 = vand.u32 %v477, 4294901760
      %479 = vmatpush1.msra.mxu0 %v478
      %480 = vmatprep.subr.mxu0 0.0
      %v481 = vand.u32 %v276, 4294901760
      %v482 = vsub.f32 %v276, %v481
      %v483 = vand.u32 %v482, 4294901760
      %v484 = vsub.f32 %v482, %v483
      %v485 = vand.u32 %v484, 4294901760
      %486 = vmatpush1.msra.mxu0 %v485
      %487 = vmatprep.subr.mxu0 0.0
      %488 = vmatpush1.msra.mxu0 0.0
      %489 = vmatprep.subr.mxu0 0.0
      %490 = vmatpush1.msra.mxu0 0.0
      %491 = vmatprep.subr.mxu0 0.0
      %492 = vmatpush1.msra.mxu0 0.0
      %493 = vmatprep.subr.mxu0 0.0
      %494 = vmatpush1.msra.mxu0 0.0
      %495 = vmatprep.subr.mxu0 0.0
      %496 = vmatpush1.msra.mxu0 0.0
      %497 = vmatprep.subr.mxu0 0.0
      %498 = vmatpush1.msra.mxu0 0.0
      %499 = vmatprep.subr.mxu0 0.0
      %500 = vmatpush1.msra.mxu0 0.0
      %501 = vmatprep.subr.mxu0 0.0
      %502 = vmatpush1.msra.mxu0 0.0
      %503 = vmatprep.subr.mxu0 0.0
      %504 = vmatpush1.msra.mxu0 0.0
      %505 = vmatprep.subr.mxu0 0.0
      %506 = vmatpush1.msra.mxu0 0.0
      %507 = vmatprep.subr.mxu0 0.0
      %508 = vmatpush1.msra.mxu0 0.0
      %509 = vmatprep.subr.mxu0 0.0
      %510 = vmatpush1.msra.mxu0 0.0
      %511 = vmatprep.subr.mxu0 0.0
      %512 = vmatpush1.msra.mxu0 0.0
      %513 = vmatprep.subr.mxu0 0.0
      %514 = vmatpush1.msra.mxu0 0.0
      %515 = vmatprep.subr.mxu0 0.0
      %516 = vmatpush1.msra.mxu0 0.0
      %517 = vmatprep.subr.mxu0 0.0
      %518 = vmatpush1.msra.mxu0 0.0
      %519 = vmatprep.mubr.f32.mxu0 0.0
      %v520 = vand.u32 %v260, 4294901760
      %521 = vmatmul.mubr.f32.gmra.mrb[0].mxu0 %v520
      %v522 = vpop.f32.mrb[0].mxu0
      %v523 = vadd.f32 %v372, %v522
      %v524 = vpop.f32.mrb[0].mxu0
      %525 = vdwg.mxu0
      %526 = vmatprep.subr.mxu0 0.0
      %v527 = vand.u32 %v261, 4294901760
      %v528 = vsub.f32 %v261, %v527
      %529 = vmatpush1.msra.mxu0 %v528
      %530 = vmatprep.subr.mxu0 0.0
      %v531 = vand.u32 %v262, 4294901760
      %v532 = vsub.f32 %v262, %v531
      %533 = vmatpush1.msra.mxu0 %v532
      %534 = vmatprep.subr.mxu0 0.0
      %v535 = vand.u32 %v263, 4294901760
      %v536 = vsub.f32 %v263, %v535
      %537 = vmatpush1.msra.mxu0 %v536
      %538 = vmatprep.subr.mxu0 0.0
      %v539 = vand.u32 %v264, 4294901760
      %v540 = vsub.f32 %v264, %v539
      %541 = vmatpush1.msra.mxu0 %v540
      %542 = vmatprep.subr.mxu0 0.0
      %v543 = vand.u32 %v265, 4294901760
      %v544 = vsub.f32 %v265, %v543
      %545 = vmatpush1.msra.mxu0 %v544
      %546 = vmatprep.subr.mxu0 0.0
      %v547 = vand.u32 %v266, 4294901760
      %v548 = vsub.f32 %v266, %v547
      %549 = vmatpush1.msra.mxu0 %v548
      %550 = vmatprep.subr.mxu0 0.0
      %v551 = vand.u32 %v267, 4294901760
      %v552 = vsub.f32 %v267, %v551
      %553 = vmatpush1.msra.mxu0 %v552
      %554 = vmatprep.subr.mxu0 0.0
      %v555 = vand.u32 %v268, 4294901760
      %v556 = vsub.f32 %v268, %v555
      %557 = vmatpush1.msra.mxu0 %v556
      %558 = vmatprep.subr.mxu0 0.0
      %v559 = vand.u32 %v269, 4294901760
      %v560 = vsub.f32 %v269, %v559
      %561 = vmatpush1.msra.mxu0 %v560
      %562 = vmatprep.subr.mxu0 0.0
      %v563 = vand.u32 %v270, 4294901760
      %v564 = vsub.f32 %v270, %v563
      %565 = vmatpush1.msra.mxu0 %v564
      %566 = vmatprep.subr.mxu0 0.0
      %v567 = vand.u32 %v271, 4294901760
      %v568 = vsub.f32 %v271, %v567
      %569 = vmatpush1.msra.mxu0 %v568
      %570 = vmatprep.subr.mxu0 0.0
      %v571 = vand.u32 %v272, 4294901760
      %v572 = vsub.f32 %v272, %v571
      %573 = vmatpush1.msra.mxu0 %v572
      %574 = vmatprep.subr.mxu0 0.0
      %v575 = vand.u32 %v273, 4294901760
      %v576 = vsub.f32 %v273, %v575
      %577 = vmatpush1.msra.mxu0 %v576
      %578 = vmatprep.subr.mxu0 0.0
      %v579 = vand.u32 %v274, 4294901760
      %v580 = vsub.f32 %v274, %v579
      %581 = vmatpush1.msra.mxu0 %v580
      %582 = vmatprep.subr.mxu0 0.0
      %v583 = vand.u32 %v275, 4294901760
      %v584 = vsub.f32 %v275, %v583
      %585 = vmatpush1.msra.mxu0 %v584
      %586 = vmatprep.subr.mxu0 0.0
      %v587 = vand.u32 %v276, 4294901760
      %v588 = vsub.f32 %v276, %v587
      %589 = vmatpush1.msra.mxu0 %v588
      %590 = vmatprep.subr.mxu0 0.0
      %591 = vmatpush1.msra.mxu0 0.0
      %592 = vmatprep.subr.mxu0 0.0
      %593 = vmatpush1.msra.mxu0 0.0
      %594 = vmatprep.subr.mxu0 0.0
      %595 = vmatpush1.msra.mxu0 0.0
      %596 = vmatprep.subr.mxu0 0.0
      %597 = vmatpush1.msra.mxu0 0.0
      %598 = vmatprep.subr.mxu0 0.0
      %599 = vmatpush1.msra.mxu0 0.0
      %600 = vmatprep.subr.mxu0 0.0
      %601 = vmatpush1.msra.mxu0 0.0
      %602 = vmatprep.subr.mxu0 0.0
      %603 = vmatpush1.msra.mxu0 0.0
      %604 = vmatprep.subr.mxu0 0.0
      %605 = vmatpush1.msra.mxu0 0.0
      %606 = vmatprep.subr.mxu0 0.0
      %607 = vmatpush1.msra.mxu0 0.0
      %608 = vmatprep.subr.mxu0 0.0
      %609 = vmatpush1.msra.mxu0 0.0
      %610 = vmatprep.subr.mxu0 0.0
      %611 = vmatpush1.msra.mxu0 0.0
      %612 = vmatprep.subr.mxu0 0.0
      %613 = vmatpush1.msra.mxu0 0.0
      %614 = vmatprep.subr.mxu0 0.0
      %615 = vmatpush1.msra.mxu0 0.0
      %616 = vmatprep.subr.mxu0 0.0
      %617 = vmatpush1.msra.mxu0 0.0
      %618 = vmatprep.subr.mxu0 0.0
      %619 = vmatpush1.msra.mxu0 0.0
      %620 = vmatprep.subr.mxu0 0.0
      %621 = vmatpush1.msra.mxu0 0.0
      %622 = vmatprep.mubr.f32.mxu0 0.0
      %v623 = vand.u32 %v260, 4294901760
      %v624 = vsub.f32 %v260, %v623
      %625 = vmatmul.mubr.f32.gmra.mrb[0].mxu0 %v624
      %v626 = vpop.f32.mrb[0].mxu0
      %v627 = vadd.f32 %v523, %v626
      %v628 = vpop.f32.mrb[0].mxu0
      %629 = vdwg.mxu0
      %630 = vmatprep.subr.mxu0 0.0
      %v631 = vand.u32 %v261, 4294901760
      %632 = vmatpush1.msra.mxu0 %v631
      %633 = vmatprep.subr.mxu0 0.0
      %v634 = vand.u32 %v262, 4294901760
      %635 = vmatpush1.msra.mxu0 %v634
      %636 = vmatprep.subr.mxu0 0.0
      %v637 = vand.u32 %v263, 4294901760
      %638 = vmatpush1.msra.mxu0 %v637
      %639 = vmatprep.subr.mxu0 0.0
      %v640 = vand.u32 %v264, 4294901760
      %641 = vmatpush1.msra.mxu0 %v640
      %642 = vmatprep.subr.mxu0 0.0
      %v643 = vand.u32 %v265, 4294901760
      %644 = vmatpush1.msra.mxu0 %v643
      %645 = vmatprep.subr.mxu0 0.0
      %v646 = vand.u32 %v266, 4294901760
      %647 = vmatpush1.msra.mxu0 %v646
      %648 = vmatprep.subr.mxu0 0.0
      %v649 = vand.u32 %v267, 4294901760
      %650 = vmatpush1.msra.mxu0 %v649
      %651 = vmatprep.subr.mxu0 0.0
      %v652 = vand.u32 %v268, 4294901760
      %653 = vmatpush1.msra.mxu0 %v652
      %654 = vmatprep.subr.mxu0 0.0
      %v655 = vand.u32 %v269, 4294901760
      %656 = vmatpush1.msra.mxu0 %v655
      %657 = vmatprep.subr.mxu0 0.0
      %v658 = vand.u32 %v270, 4294901760
      %659 = vmatpush1.msra.mxu0 %v658
      %660 = vmatprep.subr.mxu0 0.0
      %v661 = vand.u32 %v271, 4294901760
      %662 = vmatpush1.msra.mxu0 %v661
      %663 = vmatprep.subr.mxu0 0.0
      %v664 = vand.u32 %v272, 4294901760
      %665 = vmatpush1.msra.mxu0 %v664
      %666 = vmatprep.subr.mxu0 0.0
      %v667 = vand.u32 %v273, 4294901760
      %668 = vmatpush1.msra.mxu0 %v667
      %669 = vmatprep.subr.mxu0 0.0
      %v670 = vand.u32 %v274, 4294901760
      %671 = vmatpush1.msra.mxu0 %v670
      %672 = vmatprep.subr.mxu0 0.0
      %v673 = vand.u32 %v275, 4294901760
      %674 = vmatpush1.msra.mxu0 %v673
      %675 = vmatprep.subr.mxu0 0.0
      %v676 = vand.u32 %v276, 4294901760
      %677 = vmatpush1.msra.mxu0 %v676
      %678 = vmatprep.subr.mxu0 0.0
      %679 = vmatpush1.msra.mxu0 0.0
      %680 = vmatprep.subr.mxu0 0.0
      %681 = vmatpush1.msra.mxu0 0.0
      %682 = vmatprep.subr.mxu0 0.0
      %683 = vmatpush1.msra.mxu0 0.0
      %684 = vmatprep.subr.mxu0 0.0
      %685 = vmatpush1.msra.mxu0 0.0
      %686 = vmatprep.subr.mxu0 0.0
      %687 = vmatpush1.msra.mxu0 0.0
      %688 = vmatprep.subr.mxu0 0.0
      %689 = vmatpush1.msra.mxu0 0.0
      %690 = vmatprep.subr.mxu0 0.0
      %691 = vmatpush1.msra.mxu0 0.0
      %692 = vmatprep.subr.mxu0 0.0
      %693 = vmatpush1.msra.mxu0 0.0
      %694 = vmatprep.subr.mxu0 0.0
      %695 = vmatpush1.msra.mxu0 0.0
      %696 = vmatprep.subr.mxu0 0.0
      %697 = vmatpush1.msra.mxu0 0.0
      %698 = vmatprep.subr.mxu0 0.0
      %699 = vmatpush1.msra.mxu0 0.0
      %700 = vmatprep.subr.mxu0 0.0
      %701 = vmatpush1.msra.mxu0 0.0
      %702 = vmatprep.subr.mxu0 0.0
      %703 = vmatpush1.msra.mxu0 0.0
      %704 = vmatprep.subr.mxu0 0.0
      %705 = vmatpush1.msra.mxu0 0.0
      %706 = vmatprep.subr.mxu0 0.0
      %707 = vmatpush1.msra.mxu0 0.0
      %708 = vmatprep.subr.mxu0 0.0
      %709 = vmatpush1.msra.mxu0 0.0
      %710 = vmatprep.mubr.f32.mxu0 0.0
      %v711 = vand.u32 %v260, 4294901760
      %v712 = vsub.f32 %v260, %v711
      %v713 = vand.u32 %v712, 4294901760
      %714 = vmatmul.mubr.f32.gmra.mrb[0].mxu0 %v713
      %v715 = vpop.f32.mrb[0].mxu0
      %v716 = vadd.f32 %v627, %v715
      %v717 = vpop.f32.mrb[0].mxu0
      %718 = vdwg.mxu0
      %719 = vmatprep.subr.mxu0 0.0
      %v720 = vand.u32 %v261, 4294901760
      %v721 = vsub.f32 %v261, %v720
      %v722 = vand.u32 %v721, 4294901760
      %723 = vmatpush1.msra.mxu0 %v722
      %724 = vmatprep.subr.mxu0 0.0
      %v725 = vand.u32 %v262, 4294901760
      %v726 = vsub.f32 %v262, %v725
      %v727 = vand.u32 %v726, 4294901760
      %728 = vmatpush1.msra.mxu0 %v727
      %729 = vmatprep.subr.mxu0 0.0
      %v730 = vand.u32 %v263, 4294901760
      %v731 = vsub.f32 %v263, %v730
      %v732 = vand.u32 %v731, 4294901760
      %733 = vmatpush1.msra.mxu0 %v732
      %734 = vmatprep.subr.mxu0 0.0
      %v735 = vand.u32 %v264, 4294901760
      %v736 = vsub.f32 %v264, %v735
      %v737 = vand.u32 %v736, 4294901760
      %738 = vmatpush1.msra.mxu0 %v737
      %739 = vmatprep.subr.mxu0 0.0
      %v740 = vand.u32 %v265, 4294901760
      %v741 = vsub.f32 %v265, %v740
      %v742 = vand.u32 %v741, 4294901760
      %743 = vmatpush1.msra.mxu0 %v742
      %744 = vmatprep.subr.mxu0 0.0
      %v745 = vand.u32 %v266, 4294901760
      %v746 = vsub.f32 %v266, %v745
      %v747 = vand.u32 %v746, 4294901760
      %748 = vmatpush1.msra.mxu0 %v747
      %749 = vmatprep.subr.mxu0 0.0
      %v750 = vand.u32 %v267, 4294901760
      %v751 = vsub.f32 %v267, %v750
      %v752 = vand.u32 %v751, 4294901760
      %753 = vmatpush1.msra.mxu0 %v752
      %754 = vmatprep.subr.mxu0 0.0
      %v755 = vand.u32 %v268, 4294901760
      %v756 = vsub.f32 %v268, %v755
      %v757 = vand.u32 %v756, 4294901760
      %758 = vmatpush1.msra.mxu0 %v757
      %759 = vmatprep.subr.mxu0 0.0
      %v760 = vand.u32 %v269, 4294901760
      %v761 = vsub.f32 %v269, %v760
      %v762 = vand.u32 %v761, 4294901760
      %763 = vmatpush1.msra.mxu0 %v762
      %764 = vmatprep.subr.mxu0 0.0
      %v765 = vand.u32 %v270, 4294901760
      %v766 = vsub.f32 %v270, %v765
      %v767 = vand.u32 %v766, 4294901760
      %768 = vmatpush1.msra.mxu0 %v767
      %769 = vmatprep.subr.mxu0 0.0
      %v770 = vand.u32 %v271, 4294901760
      %v771 = vsub.f32 %v271, %v770
      %v772 = vand.u32 %v771, 4294901760
      %773 = vmatpush1.msra.mxu0 %v772
      %774 = vmatprep.subr.mxu0 0.0
      %v775 = vand.u32 %v272, 4294901760
      %v776 = vsub.f32 %v272, %v775
      %v777 = vand.u32 %v776, 4294901760
      %778 = vmatpush1.msra.mxu0 %v777
      %779 = vmatprep.subr.mxu0 0.0
      %v780 = vand.u32 %v273, 4294901760
      %v781 = vsub.f32 %v273, %v780
      %v782 = vand.u32 %v781, 4294901760
      %783 = vmatpush1.msra.mxu0 %v782
      %784 = vmatprep.subr.mxu0 0.0
      %v785 = vand.u32 %v274, 4294901760
      %v786 = vsub.f32 %v274, %v785
      %v787 = vand.u32 %v786, 4294901760
      %788 = vmatpush1.msra.mxu0 %v787
      %789 = vmatprep.subr.mxu0 0.0
      %v790 = vand.u32 %v275, 4294901760
      %v791 = vsub.f32 %v275, %v790
      %v792 = vand.u32 %v791, 4294901760
      %793 = vmatpush1.msra.mxu0 %v792
      %794 = vmatprep.subr.mxu0 0.0
      %v795 = vand.u32 %v276, 4294901760
      %v796 = vsub.f32 %v276, %v795
      %v797 = vand.u32 %v796, 4294901760
      %798 = vmatpush1.msra.mxu0 %v797
      %799 = vmatprep.subr.mxu0 0.0
      %800 = vmatpush1.msra.mxu0 0.0
      %801 = vmatprep.subr.mxu0 0.0
      %802 = vmatpush1.msra.mxu0 0.0
      %803 = vmatprep.subr.mxu0 0.0
      %804 = vmatpush1.msra.mxu0 0.0
      %805 = vmatprep.subr.mxu0 0.0
      %806 = vmatpush1.msra.mxu0 0.0
      %807 = vmatprep.subr.mxu0 0.0
      %808 = vmatpush1.msra.mxu0 0.0
      %809 = vmatprep.subr.mxu0 0.0
      %810 = vmatpush1.msra.mxu0 0.0
      %811 = vmatprep.subr.mxu0 0.0
      %812 = vmatpush1.msra.mxu0 0.0
      %813 = vmatprep.subr.mxu0 0.0
      %814 = vmatpush1.msra.mxu0 0.0
      %815 = vmatprep.subr.mxu0 0.0
      %816 = vmatpush1.msra.mxu0 0.0
      %817 = vmatprep.subr.mxu0 0.0
      %818 = vmatpush1.msra.mxu0 0.0
      %819 = vmatprep.subr.mxu0 0.0
      %820 = vmatpush1.msra.mxu0 0.0
      %821 = vmatprep.subr.mxu0 0.0
      %822 = vmatpush1.msra.mxu0 0.0
      %823 = vmatprep.subr.mxu0 0.0
      %824 = vmatpush1.msra.mxu0 0.0
      %825 = vmatprep.subr.mxu0 0.0
      %826 = vmatpush1.msra.mxu0 0.0
      %827 = vmatprep.subr.mxu0 0.0
      %828 = vmatpush1.msra.mxu0 0.0
      %829 = vmatprep.subr.mxu0 0.0
      %830 = vmatpush1.msra.mxu0 0.0
      %831 = vmatprep.mubr.f32.mxu0 0.0
      %v832 = vand.u32 %v260, 4294901760
      %833 = vmatmul.mubr.f32.gmra.mrb[0].mxu0 %v832
      %v834 = vpop.f32.mrb[0].mxu0
      %v835 = vadd.f32 %v716, %v834
      %v836 = vpop.f32.mrb[0].mxu0
      %837 = vdwg.mxu0
      %838 = vmatprep.subr.mxu0 0.0
      %v839 = vand.u32 %v261, 4294901760
      %840 = vmatpush1.msra.mxu0 %v839
      %841 = vmatprep.subr.mxu0 0.0
      %v842 = vand.u32 %v262, 4294901760
      %843 = vmatpush1.msra.mxu0 %v842
      %844 = vmatprep.subr.mxu0 0.0
      %v845 = vand.u32 %v263, 4294901760
      %846 = vmatpush1.msra.mxu0 %v845
      %847 = vmatprep.subr.mxu0 0.0
      %v848 = vand.u32 %v264, 4294901760
      %849 = vmatpush1.msra.mxu0 %v848
      %850 = vmatprep.subr.mxu0 0.0
      %v851 = vand.u32 %v265, 4294901760
      %852 = vmatpush1.msra.mxu0 %v851
      %853 = vmatprep.subr.mxu0 0.0
      %v854 = vand.u32 %v266, 4294901760
      %855 = vmatpush1.msra.mxu0 %v854
      %856 = vmatprep.subr.mxu0 0.0
      %v857 = vand.u32 %v267, 4294901760
      %858 = vmatpush1.msra.mxu0 %v857
      %859 = vmatprep.subr.mxu0 0.0
      %v860 = vand.u32 %v268, 4294901760
      %861 = vmatpush1.msra.mxu0 %v860
      %862 = vmatprep.subr.mxu0 0.0
      %v863 = vand.u32 %v269, 4294901760
      %864 = vmatpush1.msra.mxu0 %v863
      %865 = vmatprep.subr.mxu0 0.0
      %v866 = vand.u32 %v270, 4294901760
      %867 = vmatpush1.msra.mxu0 %v866
      %868 = vmatprep.subr.mxu0 0.0
      %v869 = vand.u32 %v271, 4294901760
      %870 = vmatpush1.msra.mxu0 %v869
      %871 = vmatprep.subr.mxu0 0.0
      %v872 = vand.u32 %v272, 4294901760
      %873 = vmatpush1.msra.mxu0 %v872
      %874 = vmatprep.subr.mxu0 0.0
      %v875 = vand.u32 %v273, 4294901760
      %876 = vmatpush1.msra.mxu0 %v875
      %877 = vmatprep.subr.mxu0 0.0
      %v878 = vand.u32 %v274, 4294901760
      %879 = vmatpush1.msra.mxu0 %v878
      %880 = vmatprep.subr.mxu0 0.0
      %v881 = vand.u32 %v275, 4294901760
      %882 = vmatpush1.msra.mxu0 %v881
      %883 = vmatprep.subr.mxu0 0.0
      %v884 = vand.u32 %v276, 4294901760
      %885 = vmatpush1.msra.mxu0 %v884
      %886 = vmatprep.subr.mxu0 0.0
      %887 = vmatpush1.msra.mxu0 0.0
      %888 = vmatprep.subr.mxu0 0.0
      %889 = vmatpush1.msra.mxu0 0.0
      %890 = vmatprep.subr.mxu0 0.0
      %891 = vmatpush1.msra.mxu0 0.0
      %892 = vmatprep.subr.mxu0 0.0
      %893 = vmatpush1.msra.mxu0 0.0
      %894 = vmatprep.subr.mxu0 0.0
      %895 = vmatpush1.msra.mxu0 0.0
      %896 = vmatprep.subr.mxu0 0.0
      %897 = vmatpush1.msra.mxu0 0.0
      %898 = vmatprep.subr.mxu0 0.0
      %899 = vmatpush1.msra.mxu0 0.0
      %900 = vmatprep.subr.mxu0 0.0
      %901 = vmatpush1.msra.mxu0 0.0
      %902 = vmatprep.subr.mxu0 0.0
      %903 = vmatpush1.msra.mxu0 0.0
      %904 = vmatprep.subr.mxu0 0.0
      %905 = vmatpush1.msra.mxu0 0.0
      %906 = vmatprep.subr.mxu0 0.0
      %907 = vmatpush1.msra.mxu0 0.0
      %908 = vmatprep.subr.mxu0 0.0
      %909 = vmatpush1.msra.mxu0 0.0
      %910 = vmatprep.subr.mxu0 0.0
      %911 = vmatpush1.msra.mxu0 0.0
      %912 = vmatprep.subr.mxu0 0.0
      %913 = vmatpush1.msra.mxu0 0.0
      %914 = vmatprep.subr.mxu0 0.0
      %915 = vmatpush1.msra.mxu0 0.0
      %916 = vmatprep.subr.mxu0 0.0
      %917 = vmatpush1.msra.mxu0 0.0
      %918 = vmatprep.mubr.f32.mxu0 0.0
      %v919 = vand.u32 %v260, 4294901760
      %920 = vmatmul.mubr.f32.gmra.mrb[0].mxu0 %v919
      %v921 = vpop.f32.mrb[0].mxu0
      %v922 = vadd.f32 %v835, %v921
      %v923 = vpop.f32.mrb[0].mxu0
      %924 = vdwg.mxu0
      %v925 = vld [vmem:[%s3] sm:$0xff]
      %v926 = vld [vmem:[%s3 + $0x8] sm:$0xff]
      %v927 = vld [vmem:[%s3 + $0x10] sm:$0xff]
      %v928 = vld [vmem:[%s3 + $0x18] sm:$0xff]
      %v929 = vld [vmem:[%s3 + $0x20] sm:$0xff]
      %v930 = vld [vmem:[%s3 + $0x28] sm:$0xff]
      %v931 = vld [vmem:[%s3 + $0x30] sm:$0xff]
      %v932 = vld [vmem:[%s3 + $0x38] sm:$0xff]
      %v933 = vld [vmem:[%s3 + $0x40] sm:$0xff]
      %v934 = vld [vmem:[%s3 + $0x48] sm:$0xff]
      %v935 = vld [vmem:[%s3 + $0x50] sm:$0xff]
      %v936 = vld [vmem:[%s3 + $0x58] sm:$0xff]
      %v937 = vld [vmem:[%s3 + $0x60] sm:$0xff]
      %v938 = vld [vmem:[%s3 + $0x68] sm:$0xff]
      %v939 = vld [vmem:[%s3 + $0x70] sm:$0xff]
      %v940 = vld [vmem:[%s3 + $0x78] sm:$0xff]
      %v941 = vld [vmem:[%s3 + $0x80] sm:$0xff]
      %v942 = vld [vmem:[%s3 + $0x88] sm:$0xff]
      %v943 = vld [vmem:[%s3 + $0x90] sm:$0xff]
      %v944 = vld [vmem:[%s3 + $0x98] sm:$0xff]
      %v945 = vld [vmem:[%s3 + $0xa0] sm:$0xff]
      %v946 = vld [vmem:[%s3 + $0xa8] sm:$0xff]
      %v947 = vld [vmem:[%s3 + $0xb0] sm:$0xff]
      %v948 = vld [vmem:[%s3 + $0xb8] sm:$0xff]
      %v949 = vld [vmem:[%s3 + $0xc0] sm:$0xff]
      %v950 = vld [vmem:[%s3 + $0xc8] sm:$0xff]
      %v951 = vld [vmem:[%s3 + $0xd0] sm:$0xff]
      %v952 = vld [vmem:[%s3 + $0xd8] sm:$0xff]
      %v953 = vld [vmem:[%s3 + $0xe0] sm:$0xff]
      %v954 = vld [vmem:[%s3 + $0xe8] sm:$0xff]
      %v955 = vld [vmem:[%s3 + $0xf0] sm:$0xff]
      %v956 = vld [vmem:[%s3 + $0xf8] sm:$0xff]
      %v957 = vld [vmem:[%s4] sm:$0x3]
      %v959 = vlaneseq
      %v960 = vshrl.u32 %v959, 7
      %v961 = vsub.s32 0, %v960
      %v962 = vrot.slane %v957, %v961
      %v963 = vlaneseq
      %v964 = vshrl.u32 %v963, 7
      %v965 = vsub.s32 1, %v964
      %v966 = vrot.slane %v957, %v965
      %v969 = vand.u32 %v926, 4294901760
      %970 = vmatprep.subr.mxu0 %v969
      %v971 = vand.u32 %v925, 4294901760
      %972 = vmatpush1.msra.mxu0 %v971
      %v973 = vand.u32 %v928, 4294901760
      %974 = vmatprep.subr.mxu0 %v973
      %v975 = vand.u32 %v927, 4294901760
      %976 = vmatpush1.msra.mxu0 %v975
      %v977 = vand.u32 %v930, 4294901760
      %978 = vmatprep.subr.mxu0 %v977
      %v979 = vand.u32 %v929, 4294901760
      %980 = vmatpush1.msra.mxu0 %v979
      %v981 = vand.u32 %v932, 4294901760
      %982 = vmatprep.subr.mxu0 %v981
      %v983 = vand.u32 %v931, 4294901760
      %984 = vmatpush1.msra.mxu0 %v983
      %v985 = vand.u32 %v934, 4294901760
      %986 = vmatprep.subr.mxu0 %v985
      %v987 = vand.u32 %v933, 4294901760
      %988 = vmatpush1.msra.mxu0 %v987
      %v989 = vand.u32 %v936, 4294901760
      %990 = vmatprep.subr.mxu0 %v989
      %v991 = vand.u32 %v935, 4294901760
      %992 = vmatpush1.msra.mxu0 %v991
      %v993 = vand.u32 %v938, 4294901760
      %994 = vmatprep.subr.mxu0 %v993
      %v995 = vand.u32 %v937, 4294901760
      %996 = vmatpush1.msra.mxu0 %v995
      %v997 = vand.u32 %v940, 4294901760
      %998 = vmatprep.subr.mxu0 %v997
      %v999 = vand.u32 %v939, 4294901760
      %1000 = vmatpush1.msra.mxu0 %v999
      %v1001 = vand.u32 %v942, 4294901760
      %1002 = vmatprep.subr.mxu0 %v1001
      %v1003 = vand.u32 %v941, 4294901760
      %1004 = vmatpush1.msra.mxu0 %v1003
      %v1005 = vand.u32 %v944, 4294901760
      %1006 = vmatprep.subr.mxu0 %v1005
      %v1007 = vand.u32 %v943, 4294901760
      %1008 = vmatpush1.msra.mxu0 %v1007
      %v1009 = vand.u32 %v946, 4294901760
      %1010 = vmatprep.subr.mxu0 %v1009
      %v1011 = vand.u32 %v945, 4294901760
      %1012 = vmatpush1.msra.mxu0 %v1011
      %v1013 = vand.u32 %v948, 4294901760
      %1014 = vmatprep.subr.mxu0 %v1013
      %v1015 = vand.u32 %v947, 4294901760
      %1016 = vmatpush1.msra.mxu0 %v1015
      %v1017 = vand.u32 %v950, 4294901760
      %1018 = vmatprep.subr.mxu0 %v1017
      %v1019 = vand.u32 %v949, 4294901760
      %1020 = vmatpush1.msra.mxu0 %v1019
      %v1021 = vand.u32 %v952, 4294901760
      %1022 = vmatprep.subr.mxu0 %v1021
      %v1023 = vand.u32 %v951, 4294901760
      %1024 = vmatpush1.msra.mxu0 %v1023
      %v1025 = vand.u32 %v954, 4294901760
      %1026 = vmatprep.subr.mxu0 %v1025
      %v1027 = vand.u32 %v953, 4294901760
      %1028 = vmatpush1.msra.mxu0 %v1027
      %v1029 = vand.u32 %v956, 4294901760
      %1030 = vmatprep.subr.mxu0 %v1029
      %v1031 = vand.u32 %v955, 4294901760
      %1032 = vmatpush1.msra.mxu0 %v1031
      %1033 = vmatprep.subr.mxu0 0.0
      %1034 = vmatpush1.msra.mxu0 0.0
      %1035 = vmatprep.subr.mxu0 0.0
      %1036 = vmatpush1.msra.mxu0 0.0
      %1037 = vmatprep.subr.mxu0 0.0
      %1038 = vmatpush1.msra.mxu0 0.0
      %1039 = vmatprep.subr.mxu0 0.0
      %1040 = vmatpush1.msra.mxu0 0.0
      %1041 = vmatprep.subr.mxu0 0.0
      %1042 = vmatpush1.msra.mxu0 0.0
      %1043 = vmatprep.subr.mxu0 0.0
      %1044 = vmatpush1.msra.mxu0 0.0
      %1045 = vmatprep.subr.mxu0 0.0
      %1046 = vmatpush1.msra.mxu0 0.0
      %1047 = vmatprep.subr.mxu0 0.0
      %1048 = vmatpush1.msra.mxu0 0.0
      %1049 = vmatprep.subr.mxu0 0.0
      %1050 = vmatpush1.msra.mxu0 0.0
      %1051 = vmatprep.subr.mxu0 0.0
      %1052 = vmatpush1.msra.mxu0 0.0
      %1053 = vmatprep.subr.mxu0 0.0
      %1054 = vmatpush1.msra.mxu0 0.0
      %1055 = vmatprep.subr.mxu0 0.0
      %1056 = vmatpush1.msra.mxu0 0.0
      %1057 = vmatprep.subr.mxu0 0.0
      %1058 = vmatpush1.msra.mxu0 0.0
      %1059 = vmatprep.subr.mxu0 0.0
      %1060 = vmatpush1.msra.mxu0 0.0
      %1061 = vmatprep.subr.mxu0 0.0
      %1062 = vmatpush1.msra.mxu0 0.0
      %1063 = vmatprep.subr.mxu0 0.0
      %1064 = vmatpush1.msra.mxu0 0.0
      %1065 = vmatprep.mubr.f32.mxu0 0.0
      %v1066 = vand.u32 %v260, 4294901760
      %v1067 = vsub.f32 %v260, %v1066
      %v1068 = vand.u32 %v1067, 4294901760
      %v1069 = vsub.f32 %v1067, %v1068
      %v1070 = vand.u32 %v1069, 4294901760
      %1071 = vmatmul.mubr.f32.gmra.mrb[0].mxu0 %v1070
      %v1072 = vpop.f32.mrb[0].mxu0
      %v1073 = vadd.f32 %v962, %v1072
      %v1074 = vpop.f32.mrb[0].mxu0
      %v1075 = vadd.f32 %v966, %v1074
      %1076 = vdwg.mxu0
      %v1077 = vand.u32 %v926, 4294901760
      %v1078 = vsub.f32 %v926, %v1077
      %v1079 = vand.u32 %v1078, 4294901760
      %v1080 = vsub.f32 %v1078, %v1079
      %v1081 = vand.u32 %v1080, 4294901760
      %1082 = vmatprep.subr.mxu0 %v1081
      %v1083 = vand.u32 %v925, 4294901760
      %v1084 = vsub.f32 %v925, %v1083
      %v1085 = vand.u32 %v1084, 4294901760
      %v1086 = vsub.f32 %v1084, %v1085
      %v1087 = vand.u32 %v1086, 4294901760
      %1088 = vmatpush1.msra.mxu0 %v1087
      %v1089 = vand.u32 %v928, 4294901760
      %v1090 = vsub.f32 %v928, %v1089
      %v1091 = vand.u32 %v1090, 4294901760
      %v1092 = vsub.f32 %v1090, %v1091
      %v1093 = vand.u32 %v1092, 4294901760
      %1094 = vmatprep.subr.mxu0 %v1093
      %v1095 = vand.u32 %v927, 4294901760
      %v1096 = vsub.f32 %v927, %v1095
      %v1097 = vand.u32 %v1096, 4294901760
      %v1098 = vsub.f32 %v1096, %v1097
      %v1099 = vand.u32 %v1098, 4294901760
      %1100 = vmatpush1.msra.mxu0 %v1099
      %v1101 = vand.u32 %v930, 4294901760
      %v1102 = vsub.f32 %v930, %v1101
      %v1103 = vand.u32 %v1102, 4294901760
      %v1104 = vsub.f32 %v1102, %v1103
      %v1105 = vand.u32 %v1104, 4294901760
      %1106 = vmatprep.subr.mxu0 %v1105
      %v1107 = vand.u32 %v929, 4294901760
      %v1108 = vsub.f32 %v929, %v1107
      %v1109 = vand.u32 %v1108, 4294901760
      %v1110 = vsub.f32 %v1108, %v1109
      %v1111 = vand.u32 %v1110, 4294901760
      %1112 = vmatpush1.msra.mxu0 %v1111
      %v1113 = vand.u32 %v932, 4294901760
      %v1114 = vsub.f32 %v932, %v1113
      %v1115 = vand.u32 %v1114, 4294901760
      %v1116 = vsub.f32 %v1114, %v1115
      %v1117 = vand.u32 %v1116, 4294901760
      %1118 = vmatprep.subr.mxu0 %v1117
      %v1119 = vand.u32 %v931, 4294901760
      %v1120 = vsub.f32 %v931, %v1119
      %v1121 = vand.u32 %v1120, 4294901760
      %v1122 = vsub.f32 %v1120, %v1121
      %v1123 = vand.u32 %v1122, 4294901760
      %1124 = vmatpush1.msra.mxu0 %v1123
      %v1125 = vand.u32 %v934, 4294901760
      %v1126 = vsub.f32 %v934, %v1125
      %v1127 = vand.u32 %v1126, 4294901760
      %v1128 = vsub.f32 %v1126, %v1127
      %v1129 = vand.u32 %v1128, 4294901760
      %1130 = vmatprep.subr.mxu0 %v1129
      %v1131 = vand.u32 %v933, 4294901760
      %v1132 = vsub.f32 %v933, %v1131
      %v1133 = vand.u32 %v1132, 4294901760
      %v1134 = vsub.f32 %v1132, %v1133
      %v1135 = vand.u32 %v1134, 4294901760
      %1136 = vmatpush1.msra.mxu0 %v1135
      %v1137 = vand.u32 %v936, 4294901760
      %v1138 = vsub.f32 %v936, %v1137
      %v1139 = vand.u32 %v1138, 4294901760
      %v1140 = vsub.f32 %v1138, %v1139
      %v1141 = vand.u32 %v1140, 4294901760
      %1142 = vmatprep.subr.mxu0 %v1141
      %v1143 = vand.u32 %v935, 4294901760
      %v1144 = vsub.f32 %v935, %v1143
      %v1145 = vand.u32 %v1144, 4294901760
      %v1146 = vsub.f32 %v1144, %v1145
      %v1147 = vand.u32 %v1146, 4294901760
      %1148 = vmatpush1.msra.mxu0 %v1147
      %v1149 = vand.u32 %v938, 4294901760
      %v1150 = vsub.f32 %v938, %v1149
      %v1151 = vand.u32 %v1150, 4294901760
      %v1152 = vsub.f32 %v1150, %v1151
      %v1153 = vand.u32 %v1152, 4294901760
      %1154 = vmatprep.subr.mxu0 %v1153
      %v1155 = vand.u32 %v937, 4294901760
      %v1156 = vsub.f32 %v937, %v1155
      %v1157 = vand.u32 %v1156, 4294901760
      %v1158 = vsub.f32 %v1156, %v1157
      %v1159 = vand.u32 %v1158, 4294901760
      %1160 = vmatpush1.msra.mxu0 %v1159
      %v1161 = vand.u32 %v940, 4294901760
      %v1162 = vsub.f32 %v940, %v1161
      %v1163 = vand.u32 %v1162, 4294901760
      %v1164 = vsub.f32 %v1162, %v1163
      %v1165 = vand.u32 %v1164, 4294901760
      %1166 = vmatprep.subr.mxu0 %v1165
      %v1167 = vand.u32 %v939, 4294901760
      %v1168 = vsub.f32 %v939, %v1167
      %v1169 = vand.u32 %v1168, 4294901760
      %v1170 = vsub.f32 %v1168, %v1169
      %v1171 = vand.u32 %v1170, 4294901760
      %1172 = vmatpush1.msra.mxu0 %v1171
      %v1173 = vand.u32 %v942, 4294901760
      %v1174 = vsub.f32 %v942, %v1173
      %v1175 = vand.u32 %v1174, 4294901760
      %v1176 = vsub.f32 %v1174, %v1175
      %v1177 = vand.u32 %v1176, 4294901760
      %1178 = vmatprep.subr.mxu0 %v1177
      %v1179 = vand.u32 %v941, 4294901760
      %v1180 = vsub.f32 %v941, %v1179
      %v1181 = vand.u32 %v1180, 4294901760
      %v1182 = vsub.f32 %v1180, %v1181
      %v1183 = vand.u32 %v1182, 4294901760
      %1184 = vmatpush1.msra.mxu0 %v1183
      %v1185 = vand.u32 %v944, 4294901760
      %v1186 = vsub.f32 %v944, %v1185
      %v1187 = vand.u32 %v1186, 4294901760
      %v1188 = vsub.f32 %v1186, %v1187
      %v1189 = vand.u32 %v1188, 4294901760
      %1190 = vmatprep.subr.mxu0 %v1189
      %v1191 = vand.u32 %v943, 4294901760
      %v1192 = vsub.f32 %v943, %v1191
      %v1193 = vand.u32 %v1192, 4294901760
      %v1194 = vsub.f32 %v1192, %v1193
      %v1195 = vand.u32 %v1194, 4294901760
      %1196 = vmatpush1.msra.mxu0 %v1195
      %v1197 = vand.u32 %v946, 4294901760
      %v1198 = vsub.f32 %v946, %v1197
      %v1199 = vand.u32 %v1198, 4294901760
      %v1200 = vsub.f32 %v1198, %v1199
      %v1201 = vand.u32 %v1200, 4294901760
      %1202 = vmatprep.subr.mxu0 %v1201
      %v1203 = vand.u32 %v945, 4294901760
      %v1204 = vsub.f32 %v945, %v1203
      %v1205 = vand.u32 %v1204, 4294901760
      %v1206 = vsub.f32 %v1204, %v1205
      %v1207 = vand.u32 %v1206, 4294901760
      %1208 = vmatpush1.msra.mxu0 %v1207
      %v1209 = vand.u32 %v948, 4294901760
      %v1210 = vsub.f32 %v948, %v1209
      %v1211 = vand.u32 %v1210, 4294901760
      %v1212 = vsub.f32 %v1210, %v1211
      %v1213 = vand.u32 %v1212, 4294901760
      %1214 = vmatprep.subr.mxu0 %v1213
      %v1215 = vand.u32 %v947, 4294901760
      %v1216 = vsub.f32 %v947, %v1215
      %v1217 = vand.u32 %v1216, 4294901760
      %v1218 = vsub.f32 %v1216, %v1217
      %v1219 = vand.u32 %v1218, 4294901760
      %1220 = vmatpush1.msra.mxu0 %v1219
      %v1221 = vand.u32 %v950, 4294901760
      %v1222 = vsub.f32 %v950, %v1221
      %v1223 = vand.u32 %v1222, 4294901760
      %v1224 = vsub.f32 %v1222, %v1223
      %v1225 = vand.u32 %v1224, 4294901760
      %1226 = vmatprep.subr.mxu0 %v1225
      %v1227 = vand.u32 %v949, 4294901760
      %v1228 = vsub.f32 %v949, %v1227
      %v1229 = vand.u32 %v1228, 4294901760
      %v1230 = vsub.f32 %v1228, %v1229
      %v1231 = vand.u32 %v1230, 4294901760
      %1232 = vmatpush1.msra.mxu0 %v1231
      %v1233 = vand.u32 %v952, 4294901760
      %v1234 = vsub.f32 %v952, %v1233
      %v1235 = vand.u32 %v1234, 4294901760
      %v1236 = vsub.f32 %v1234, %v1235
      %v1237 = vand.u32 %v1236, 4294901760
      %1238 = vmatprep.subr.mxu0 %v1237
      %v1239 = vand.u32 %v951, 4294901760
      %v1240 = vsub.f32 %v951, %v1239
      %v1241 = vand.u32 %v1240, 4294901760
      %v1242 = vsub.f32 %v1240, %v1241
      %v1243 = vand.u32 %v1242, 4294901760
      %1244 = vmatpush1.msra.mxu0 %v1243
      %v1245 = vand.u32 %v954, 4294901760
      %v1246 = vsub.f32 %v954, %v1245
      %v1247 = vand.u32 %v1246, 4294901760
      %v1248 = vsub.f32 %v1246, %v1247
      %v1249 = vand.u32 %v1248, 4294901760
      %1250 = vmatprep.subr.mxu0 %v1249
      %v1251 = vand.u32 %v953, 4294901760
      %v1252 = vsub.f32 %v953, %v1251
      %v1253 = vand.u32 %v1252, 4294901760
      %v1254 = vsub.f32 %v1252, %v1253
      %v1255 = vand.u32 %v1254, 4294901760
      %1256 = vmatpush1.msra.mxu0 %v1255
      %v1257 = vand.u32 %v956, 4294901760
      %v1258 = vsub.f32 %v956, %v1257
      %v1259 = vand.u32 %v1258, 4294901760
      %v1260 = vsub.f32 %v1258, %v1259
      %v1261 = vand.u32 %v1260, 4294901760
      %1262 = vmatprep.subr.mxu0 %v1261
      %v1263 = vand.u32 %v955, 4294901760
      %v1264 = vsub.f32 %v955, %v1263
      %v1265 = vand.u32 %v1264, 4294901760
      %v1266 = vsub.f32 %v1264, %v1265
      %v1267 = vand.u32 %v1266, 4294901760
      %1268 = vmatpush1.msra.mxu0 %v1267
      %1269 = vmatprep.subr.mxu0 0.0
      %1270 = vmatpush1.msra.mxu0 0.0
      %1271 = vmatprep.subr.mxu0 0.0
      %1272 = vmatpush1.msra.mxu0 0.0
      %1273 = vmatprep.subr.mxu0 0.0
      %1274 = vmatpush1.msra.mxu0 0.0
      %1275 = vmatprep.subr.mxu0 0.0
      %1276 = vmatpush1.msra.mxu0 0.0
      %1277 = vmatprep.subr.mxu0 0.0
      %1278 = vmatpush1.msra.mxu0 0.0
      %1279 = vmatprep.subr.mxu0 0.0
      %1280 = vmatpush1.msra.mxu0 0.0
      %1281 = vmatprep.subr.mxu0 0.0
      %1282 = vmatpush1.msra.mxu0 0.0
      %1283 = vmatprep.subr.mxu0 0.0
      %1284 = vmatpush1.msra.mxu0 0.0
      %1285 = vmatprep.subr.mxu0 0.0
      %1286 = vmatpush1.msra.mxu0 0.0
      %1287 = vmatprep.subr.mxu0 0.0
      %1288 = vmatpush1.msra.mxu0 0.0
      %1289 = vmatprep.subr.mxu0 0.0
      %1290 = vmatpush1.msra.mxu0 0.0
      %1291 = vmatprep.subr.mxu0 0.0
      %1292 = vmatpush1.msra.mxu0 0.0
      %1293 = vmatprep.subr.mxu0 0.0
      %1294 = vmatpush1.msra.mxu0 0.0
      %1295 = vmatprep.subr.mxu0 0.0
      %1296 = vmatpush1.msra.mxu0 0.0
      %1297 = vmatprep.subr.mxu0 0.0
      %1298 = vmatpush1.msra.mxu0 0.0
      %1299 = vmatprep.subr.mxu0 0.0
      %1300 = vmatpush1.msra.mxu0 0.0
      %1301 = vmatprep.mubr.f32.mxu0 0.0
      %v1302 = vand.u32 %v260, 4294901760
      %1303 = vmatmul.mubr.f32.gmra.mrb[0].mxu0 %v1302
      %v1304 = vpop.f32.mrb[0].mxu0
      %v1305 = vadd.f32 %v1073, %v1304
      %v1306 = vpop.f32.mrb[0].mxu0
      %v1307 = vadd.f32 %v1075, %v1306
      %1308 = vdwg.mxu0
      %v1309 = vand.u32 %v926, 4294901760
      %v1310 = vsub.f32 %v926, %v1309
      %1311 = vmatprep.subr.mxu0 %v1310
      %v1312 = vand.u32 %v925, 4294901760
      %v1313 = vsub.f32 %v925, %v1312
      %1314 = vmatpush1.msra.mxu0 %v1313
      %v1315 = vand.u32 %v928, 4294901760
      %v1316 = vsub.f32 %v928, %v1315
      %1317 = vmatprep.subr.mxu0 %v1316
      %v1318 = vand.u32 %v927, 4294901760
      %v1319 = vsub.f32 %v927, %v1318
      %1320 = vmatpush1.msra.mxu0 %v1319
      %v1321 = vand.u32 %v930, 4294901760
      %v1322 = vsub.f32 %v930, %v1321
      %1323 = vmatprep.subr.mxu0 %v1322
      %v1324 = vand.u32 %v929, 4294901760
      %v1325 = vsub.f32 %v929, %v1324
      %1326 = vmatpush1.msra.mxu0 %v1325
      %v1327 = vand.u32 %v932, 4294901760
      %v1328 = vsub.f32 %v932, %v1327
      %1329 = vmatprep.subr.mxu0 %v1328
      %v1330 = vand.u32 %v931, 4294901760
      %v1331 = vsub.f32 %v931, %v1330
      %1332 = vmatpush1.msra.mxu0 %v1331
      %v1333 = vand.u32 %v934, 4294901760
      %v1334 = vsub.f32 %v934, %v1333
      %1335 = vmatprep.subr.mxu0 %v1334
      %v1336 = vand.u32 %v933, 4294901760
      %v1337 = vsub.f32 %v933, %v1336
      %1338 = vmatpush1.msra.mxu0 %v1337
      %v1339 = vand.u32 %v936, 4294901760
      %v1340 = vsub.f32 %v936, %v1339
      %1341 = vmatprep.subr.mxu0 %v1340
      %v1342 = vand.u32 %v935, 4294901760
      %v1343 = vsub.f32 %v935, %v1342
      %1344 = vmatpush1.msra.mxu0 %v1343
      %v1345 = vand.u32 %v938, 4294901760
      %v1346 = vsub.f32 %v938, %v1345
      %1347 = vmatprep.subr.mxu0 %v1346
      %v1348 = vand.u32 %v937, 4294901760
      %v1349 = vsub.f32 %v937, %v1348
      %1350 = vmatpush1.msra.mxu0 %v1349
      %v1351 = vand.u32 %v940, 4294901760
      %v1352 = vsub.f32 %v940, %v1351
      %1353 = vmatprep.subr.mxu0 %v1352
      %v1354 = vand.u32 %v939, 4294901760
      %v1355 = vsub.f32 %v939, %v1354
      %1356 = vmatpush1.msra.mxu0 %v1355
      %v1357 = vand.u32 %v942, 4294901760
      %v1358 = vsub.f32 %v942, %v1357
      %1359 = vmatprep.subr.mxu0 %v1358
      %v1360 = vand.u32 %v941, 4294901760
      %v1361 = vsub.f32 %v941, %v1360
      %1362 = vmatpush1.msra.mxu0 %v1361
      %v1363 = vand.u32 %v944, 4294901760
      %v1364 = vsub.f32 %v944, %v1363
      %1365 = vmatprep.subr.mxu0 %v1364
      %v1366 = vand.u32 %v943, 4294901760
      %v1367 = vsub.f32 %v943, %v1366
      %1368 = vmatpush1.msra.mxu0 %v1367
      %v1369 = vand.u32 %v946, 4294901760
      %v1370 = vsub.f32 %v946, %v1369
      %1371 = vmatprep.subr.mxu0 %v1370
      %v1372 = vand.u32 %v945, 4294901760
      %v1373 = vsub.f32 %v945, %v1372
      %1374 = vmatpush1.msra.mxu0 %v1373
      %v1375 = vand.u32 %v948, 4294901760
      %v1376 = vsub.f32 %v948, %v1375
      %1377 = vmatprep.subr.mxu0 %v1376
      %v1378 = vand.u32 %v947, 4294901760
      %v1379 = vsub.f32 %v947, %v1378
      %1380 = vmatpush1.msra.mxu0 %v1379
      %v1381 = vand.u32 %v950, 4294901760
      %v1382 = vsub.f32 %v950, %v1381
      %1383 = vmatprep.subr.mxu0 %v1382
      %v1384 = vand.u32 %v949, 4294901760
      %v1385 = vsub.f32 %v949, %v1384
      %1386 = vmatpush1.msra.mxu0 %v1385
      %v1387 = vand.u32 %v952, 4294901760
      %v1388 = vsub.f32 %v952, %v1387
      %1389 = vmatprep.subr.mxu0 %v1388
      %v1390 = vand.u32 %v951, 4294901760
      %v1391 = vsub.f32 %v951, %v1390
      %1392 = vmatpush1.msra.mxu0 %v1391
      %v1393 = vand.u32 %v954, 4294901760
      %v1394 = vsub.f32 %v954, %v1393
      %1395 = vmatprep.subr.mxu0 %v1394
      %v1396 = vand.u32 %v953, 4294901760
      %v1397 = vsub.f32 %v953, %v1396
      %1398 = vmatpush1.msra.mxu0 %v1397
      %v1399 = vand.u32 %v956, 4294901760
      %v1400 = vsub.f32 %v956, %v1399
      %1401 = vmatprep.subr.mxu0 %v1400
      %v1402 = vand.u32 %v955, 4294901760
      %v1403 = vsub.f32 %v955, %v1402
      %1404 = vmatpush1.msra.mxu0 %v1403
      %1405 = vmatprep.subr.mxu0 0.0
      %1406 = vmatpush1.msra.mxu0 0.0
      %1407 = vmatprep.subr.mxu0 0.0
      %1408 = vmatpush1.msra.mxu0 0.0
      %1409 = vmatprep.subr.mxu0 0.0
      %1410 = vmatpush1.msra.mxu0 0.0
      %1411 = vmatprep.subr.mxu0 0.0
      %1412 = vmatpush1.msra.mxu0 0.0
      %1413 = vmatprep.subr.mxu0 0.0
      %1414 = vmatpush1.msra.mxu0 0.0
      %1415 = vmatprep.subr.mxu0 0.0
      %1416 = vmatpush1.msra.mxu0 0.0
      %1417 = vmatprep.subr.mxu0 0.0
      %1418 = vmatpush1.msra.mxu0 0.0
      %1419 = vmatprep.subr.mxu0 0.0
      %1420 = vmatpush1.msra.mxu0 0.0
      %1421 = vmatprep.subr.mxu0 0.0
      %1422 = vmatpush1.msra.mxu0 0.0
      %1423 = vmatprep.subr.mxu0 0.0
      %1424 = vmatpush1.msra.mxu0 0.0
      %1425 = vmatprep.subr.mxu0 0.0
      %1426 = vmatpush1.msra.mxu0 0.0
      %1427 = vmatprep.subr.mxu0 0.0
      %1428 = vmatpush1.msra.mxu0 0.0
      %1429 = vmatprep.subr.mxu0 0.0
      %1430 = vmatpush1.msra.mxu0 0.0
      %1431 = vmatprep.subr.mxu0 0.0
      %1432 = vmatpush1.msra.mxu0 0.0
      %1433 = vmatprep.subr.mxu0 0.0
      %1434 = vmatpush1.msra.mxu0 0.0
      %1435 = vmatprep.subr.mxu0 0.0
      %1436 = vmatpush1.msra.mxu0 0.0
      %1437 = vmatprep.mubr.f32.mxu0 0.0
      %v1438 = vand.u32 %v260, 4294901760
      %v1439 = vsub.f32 %v260, %v1438
      %1440 = vmatmul.mubr.f32.gmra.mrb[0].mxu0 %v1439
      %v1441 = vpop.f32.mrb[0].mxu0
      %v1442 = vadd.f32 %v1305, %v1441
      %v1443 = vpop.f32.mrb[0].mxu0
      %v1444 = vadd.f32 %v1307, %v1443
      %1445 = vdwg.mxu0
      %v1446 = vand.u32 %v926, 4294901760
      %1447 = vmatprep.subr.mxu0 %v1446
      %v1448 = vand.u32 %v925, 4294901760
      %1449 = vmatpush1.msra.mxu0 %v1448
      %v1450 = vand.u32 %v928, 4294901760
      %1451 = vmatprep.subr.mxu0 %v1450
      %v1452 = vand.u32 %v927, 4294901760
      %1453 = vmatpush1.msra.mxu0 %v1452
      %v1454 = vand.u32 %v930, 4294901760
      %1455 = vmatprep.subr.mxu0 %v1454
      %v1456 = vand.u32 %v929, 4294901760
      %1457 = vmatpush1.msra.mxu0 %v1456
      %v1458 = vand.u32 %v932, 4294901760
      %1459 = vmatprep.subr.mxu0 %v1458
      %v1460 = vand.u32 %v931, 4294901760
      %1461 = vmatpush1.msra.mxu0 %v1460
      %v1462 = vand.u32 %v934, 4294901760
      %1463 = vmatprep.subr.mxu0 %v1462
      %v1464 = vand.u32 %v933, 4294901760
      %1465 = vmatpush1.msra.mxu0 %v1464
      %v1466 = vand.u32 %v936, 4294901760
      %1467 = vmatprep.subr.mxu0 %v1466
      %v1468 = vand.u32 %v935, 4294901760
      %1469 = vmatpush1.msra.mxu0 %v1468
      %v1470 = vand.u32 %v938, 4294901760
      %1471 = vmatprep.subr.mxu0 %v1470
      %v1472 = vand.u32 %v937, 4294901760
      %1473 = vmatpush1.msra.mxu0 %v1472
      %v1474 = vand.u32 %v940, 4294901760
      %1475 = vmatprep.subr.mxu0 %v1474
      %v1476 = vand.u32 %v939, 4294901760
      %1477 = vmatpush1.msra.mxu0 %v1476
      %v1478 = vand.u32 %v942, 4294901760
      %1479 = vmatprep.subr.mxu0 %v1478
      %v1480 = vand.u32 %v941, 4294901760
      %1481 = vmatpush1.msra.mxu0 %v1480
      %v1482 = vand.u32 %v944, 4294901760
      %1483 = vmatprep.subr.mxu0 %v1482
      %v1484 = vand.u32 %v943, 4294901760
      %1485 = vmatpush1.msra.mxu0 %v1484
      %v1486 = vand.u32 %v946, 4294901760
      %1487 = vmatprep.subr.mxu0 %v1486
      %v1488 = vand.u32 %v945, 4294901760
      %1489 = vmatpush1.msra.mxu0 %v1488
      %v1490 = vand.u32 %v948, 4294901760
      %1491 = vmatprep.subr.mxu0 %v1490
      %v1492 = vand.u32 %v947, 4294901760
      %1493 = vmatpush1.msra.mxu0 %v1492
      %v1494 = vand.u32 %v950, 4294901760
      %1495 = vmatprep.subr.mxu0 %v1494
      %v1496 = vand.u32 %v949, 4294901760
      %1497 = vmatpush1.msra.mxu0 %v1496
      %v1498 = vand.u32 %v952, 4294901760
      %1499 = vmatprep.subr.mxu0 %v1498
      %v1500 = vand.u32 %v951, 4294901760
      %1501 = vmatpush1.msra.mxu0 %v1500
      %v1502 = vand.u32 %v954, 4294901760
      %1503 = vmatprep.subr.mxu0 %v1502
      %v1504 = vand.u32 %v953, 4294901760
      %1505 = vmatpush1.msra.mxu0 %v1504
      %v1506 = vand.u32 %v956, 4294901760
      %1507 = vmatprep.subr.mxu0 %v1506
      %v1508 = vand.u32 %v955, 4294901760
      %1509 = vmatpush1.msra.mxu0 %v1508
      %1510 = vmatprep.subr.mxu0 0.0
      %1511 = vmatpush1.msra.mxu0 0.0
      %1512 = vmatprep.subr.mxu0 0.0
      %1513 = vmatpush1.msra.mxu0 0.0
      %1514 = vmatprep.subr.mxu0 0.0
      %1515 = vmatpush1.msra.mxu0 0.0
      %1516 = vmatprep.subr.mxu0 0.0
      %1517 = vmatpush1.msra.mxu0 0.0
      %1518 = vmatprep.subr.mxu0 0.0
      %1519 = vmatpush1.msra.mxu0 0.0
      %1520 = vmatprep.subr.mxu0 0.0
      %1521 = vmatpush1.msra.mxu0 0.0
      %1522 = vmatprep.subr.mxu0 0.0
      %1523 = vmatpush1.msra.mxu0 0.0
      %1524 = vmatprep.subr.mxu0 0.0
      %1525 = vmatpush1.msra.mxu0 0.0
      %1526 = vmatprep.subr.mxu0 0.0
      %1527 = vmatpush1.msra.mxu0 0.0
      %1528 = vmatprep.subr.mxu0 0.0
      %1529 = vmatpush1.msra.mxu0 0.0
      %1530 = vmatprep.subr.mxu0 0.0
      %1531 = vmatpush1.msra.mxu0 0.0
      %1532 = vmatprep.subr.mxu0 0.0
      %1533 = vmatpush1.msra.mxu0 0.0
      %1534 = vmatprep.subr.mxu0 0.0
      %1535 = vmatpush1.msra.mxu0 0.0
      %1536 = vmatprep.subr.mxu0 0.0
      %1537 = vmatpush1.msra.mxu0 0.0
      %1538 = vmatprep.subr.mxu0 0.0
      %1539 = vmatpush1.msra.mxu0 0.0
      %1540 = vmatprep.subr.mxu0 0.0
      %1541 = vmatpush1.msra.mxu0 0.0
      %1542 = vmatprep.mubr.f32.mxu0 0.0
      %v1543 = vand.u32 %v260, 4294901760
      %v1544 = vsub.f32 %v260, %v1543
      %v1545 = vand.u32 %v1544, 4294901760
      %1546 = vmatmul.mubr.f32.gmra.mrb[0].mxu0 %v1545
      %v1547 = vpop.f32.mrb[0].mxu0
      %v1548 = vadd.f32 %v1442, %v1547
      %v1549 = vpop.f32.mrb[0].mxu0
      %v1550 = vadd.f32 %v1444, %v1549
      %1551 = vdwg.mxu0
      %v1552 = vand.u32 %v926, 4294901760
      %v1553 = vsub.f32 %v926, %v1552
      %v1554 = vand.u32 %v1553, 4294901760
      %1555 = vmatprep.subr.mxu0 %v1554
      %v1556 = vand.u32 %v925, 4294901760
      %v1557 = vsub.f32 %v925, %v1556
      %v1558 = vand.u32 %v1557, 4294901760
      %1559 = vmatpush1.msra.mxu0 %v1558
      %v1560 = vand.u32 %v928, 4294901760
      %v1561 = vsub.f32 %v928, %v1560
      %v1562 = vand.u32 %v1561, 4294901760
      %1563 = vmatprep.subr.mxu0 %v1562
      %v1564 = vand.u32 %v927, 4294901760
      %v1565 = vsub.f32 %v927, %v1564
      %v1566 = vand.u32 %v1565, 4294901760
      %1567 = vmatpush1.msra.mxu0 %v1566
      %v1568 = vand.u32 %v930, 4294901760
      %v1569 = vsub.f32 %v930, %v1568
      %v1570 = vand.u32 %v1569, 4294901760
      %1571 = vmatprep.subr.mxu0 %v1570
      %v1572 = vand.u32 %v929, 4294901760
      %v1573 = vsub.f32 %v929, %v1572
      %v1574 = vand.u32 %v1573, 4294901760
      %1575 = vmatpush1.msra.mxu0 %v1574
      %v1576 = vand.u32 %v932, 4294901760
      %v1577 = vsub.f32 %v932, %v1576
      %v1578 = vand.u32 %v1577, 4294901760
      %1579 = vmatprep.subr.mxu0 %v1578
      %v1580 = vand.u32 %v931, 4294901760
      %v1581 = vsub.f32 %v931, %v1580
      %v1582 = vand.u32 %v1581, 4294901760
      %1583 = vmatpush1.msra.mxu0 %v1582
      %v1584 = vand.u32 %v934, 4294901760
      %v1585 = vsub.f32 %v934, %v1584
      %v1586 = vand.u32 %v1585, 4294901760
      %1587 = vmatprep.subr.mxu0 %v1586
      %v1588 = vand.u32 %v933, 4294901760
      %v1589 = vsub.f32 %v933, %v1588
      %v1590 = vand.u32 %v1589, 4294901760
      %1591 = vmatpush1.msra.mxu0 %v1590
      %v1592 = vand.u32 %v936, 4294901760
      %v1593 = vsub.f32 %v936, %v1592
      %v1594 = vand.u32 %v1593, 4294901760
      %1595 = vmatprep.subr.mxu0 %v1594
      %v1596 = vand.u32 %v935, 4294901760
      %v1597 = vsub.f32 %v935, %v1596
      %v1598 = vand.u32 %v1597, 4294901760
      %1599 = vmatpush1.msra.mxu0 %v1598
      %v1600 = vand.u32 %v938, 4294901760
      %v1601 = vsub.f32 %v938, %v1600
      %v1602 = vand.u32 %v1601, 4294901760
      %1603 = vmatprep.subr.mxu0 %v1602
      %v1604 = vand.u32 %v937, 4294901760
      %v1605 = vsub.f32 %v937, %v1604
      %v1606 = vand.u32 %v1605, 4294901760
      %1607 = vmatpush1.msra.mxu0 %v1606
      %v1608 = vand.u32 %v940, 4294901760
      %v1609 = vsub.f32 %v940, %v1608
      %v1610 = vand.u32 %v1609, 4294901760
      %1611 = vmatprep.subr.mxu0 %v1610
      %v1612 = vand.u32 %v939, 4294901760
      %v1613 = vsub.f32 %v939, %v1612
      %v1614 = vand.u32 %v1613, 4294901760
      %1615 = vmatpush1.msra.mxu0 %v1614
      %v1616 = vand.u32 %v942, 4294901760
      %v1617 = vsub.f32 %v942, %v1616
      %v1618 = vand.u32 %v1617, 4294901760
      %1619 = vmatprep.subr.mxu0 %v1618
      %v1620 = vand.u32 %v941, 4294901760
      %v1621 = vsub.f32 %v941, %v1620
      %v1622 = vand.u32 %v1621, 4294901760
      %1623 = vmatpush1.msra.mxu0 %v1622
      %v1624 = vand.u32 %v944, 4294901760
      %v1625 = vsub.f32 %v944, %v1624
      %v1626 = vand.u32 %v1625, 4294901760
      %1627 = vmatprep.subr.mxu0 %v1626
      %v1628 = vand.u32 %v943, 4294901760
      %v1629 = vsub.f32 %v943, %v1628
      %v1630 = vand.u32 %v1629, 4294901760
      %1631 = vmatpush1.msra.mxu0 %v1630
      %v1632 = vand.u32 %v946, 4294901760
      %v1633 = vsub.f32 %v946, %v1632
      %v1634 = vand.u32 %v1633, 4294901760
      %1635 = vmatprep.subr.mxu0 %v1634
      %v1636 = vand.u32 %v945, 4294901760
      %v1637 = vsub.f32 %v945, %v1636
      %v1638 = vand.u32 %v1637, 4294901760
      %1639 = vmatpush1.msra.mxu0 %v1638
      %v1640 = vand.u32 %v948, 4294901760
      %v1641 = vsub.f32 %v948, %v1640
      %v1642 = vand.u32 %v1641, 4294901760
      %1643 = vmatprep.subr.mxu0 %v1642
      %v1644 = vand.u32 %v947, 4294901760
      %v1645 = vsub.f32 %v947, %v1644
      %v1646 = vand.u32 %v1645, 4294901760
      %1647 = vmatpush1.msra.mxu0 %v1646
      %v1648 = vand.u32 %v950, 4294901760
      %v1649 = vsub.f32 %v950, %v1648
      %v1650 = vand.u32 %v1649, 4294901760
      %1651 = vmatprep.subr.mxu0 %v1650
      %v1652 = vand.u32 %v949, 4294901760
      %v1653 = vsub.f32 %v949, %v1652
      %v1654 = vand.u32 %v1653, 4294901760
      %1655 = vmatpush1.msra.mxu0 %v1654
      %v1656 = vand.u32 %v952, 4294901760
      %v1657 = vsub.f32 %v952, %v1656
      %v1658 = vand.u32 %v1657, 4294901760
      %1659 = vmatprep.subr.mxu0 %v1658
      %v1660 = vand.u32 %v951, 4294901760
      %v1661 = vsub.f32 %v951, %v1660
      %v1662 = vand.u32 %v1661, 4294901760
      %1663 = vmatpush1.msra.mxu0 %v1662
      %v1664 = vand.u32 %v954, 4294901760
      %v1665 = vsub.f32 %v954, %v1664
      %v1666 = vand.u32 %v1665, 4294901760
      %1667 = vmatprep.subr.mxu0 %v1666
      %v1668 = vand.u32 %v953, 4294901760
      %v1669 = vsub.f32 %v953, %v1668
      %v1670 = vand.u32 %v1669, 4294901760
      %1671 = vmatpush1.msra.mxu0 %v1670
      %v1672 = vand.u32 %v956, 4294901760
      %v1673 = vsub.f32 %v956, %v1672
      %v1674 = vand.u32 %v1673, 4294901760
      %1675 = vmatprep.subr.mxu0 %v1674
      %v1676 = vand.u32 %v955, 4294901760
      %v1677 = vsub.f32 %v955, %v1676
      %v1678 = vand.u32 %v1677, 4294901760
      %1679 = vmatpush1.msra.mxu0 %v1678
      %1680 = vmatprep.subr.mxu0 0.0
      %1681 = vmatpush1.msra.mxu0 0.0
      %1682 = vmatprep.subr.mxu0 0.0
      %1683 = vmatpush1.msra.mxu0 0.0
      %1684 = vmatprep.subr.mxu0 0.0
      %1685 = vmatpush1.msra.mxu0 0.0
      %1686 = vmatprep.subr.mxu0 0.0
      %1687 = vmatpush1.msra.mxu0 0.0
      %1688 = vmatprep.subr.mxu0 0.0
      %1689 = vmatpush1.msra.mxu0 0.0
      %1690 = vmatprep.subr.mxu0 0.0
      %1691 = vmatpush1.msra.mxu0 0.0
      %1692 = vmatprep.subr.mxu0 0.0
      %1693 = vmatpush1.msra.mxu0 0.0
      %1694 = vmatprep.subr.mxu0 0.0
      %1695 = vmatpush1.msra.mxu0 0.0
      %1696 = vmatprep.subr.mxu0 0.0
      %1697 = vmatpush1.msra.mxu0 0.0
      %1698 = vmatprep.subr.mxu0 0.0
      %1699 = vmatpush1.msra.mxu0 0.0
      %1700 = vmatprep.subr.mxu0 0.0
      %1701 = vmatpush1.msra.mxu0 0.0
      %1702 = vmatprep.subr.mxu0 0.0
      %1703 = vmatpush1.msra.mxu0 0.0
      %1704 = vmatprep.subr.mxu0 0.0
      %1705 = vmatpush1.msra.mxu0 0.0
      %1706 = vmatprep.subr.mxu0 0.0
      %1707 = vmatpush1.msra.mxu0 0.0
      %1708 = vmatprep.subr.mxu0 0.0
      %1709 = vmatpush1.msra.mxu0 0.0
      %1710 = vmatprep.subr.mxu0 0.0
      %1711 = vmatpush1.msra.mxu0 0.0
      %1712 = vmatprep.mubr.f32.mxu0 0.0
      %v1713 = vand.u32 %v260, 4294901760
      %1714 = vmatmul.mubr.f32.gmra.mrb[0].mxu0 %v1713
      %v1715 = vpop.f32.mrb[0].mxu0
      %v1716 = vadd.f32 %v1548, %v1715
      %v1717 = vpop.f32.mrb[0].mxu0
      %v1718 = vadd.f32 %v1550, %v1717
      %1719 = vdwg.mxu0
      %v1720 = vand.u32 %v926, 4294901760
      %1721 = vmatprep.subr.mxu0 %v1720
      %v1722 = vand.u32 %v925, 4294901760
      %1723 = vmatpush1.msra.mxu0 %v1722
      %v1724 = vand.u32 %v928, 4294901760
      %1725 = vmatprep.subr.mxu0 %v1724
      %v1726 = vand.u32 %v927, 4294901760
      %1727 = vmatpush1.msra.mxu0 %v1726
      %v1728 = vand.u32 %v930, 4294901760
      %1729 = vmatprep.subr.mxu0 %v1728
      %v1730 = vand.u32 %v929, 4294901760
      %1731 = vmatpush1.msra.mxu0 %v1730
      %v1732 = vand.u32 %v932, 4294901760
      %1733 = vmatprep.subr.mxu0 %v1732
      %v1734 = vand.u32 %v931, 4294901760
      %1735 = vmatpush1.msra.mxu0 %v1734
      %v1736 = vand.u32 %v934, 4294901760
      %1737 = vmatprep.subr.mxu0 %v1736
      %v1738 = vand.u32 %v933, 4294901760
      %1739 = vmatpush1.msra.mxu0 %v1738
      %v1740 = vand.u32 %v936, 4294901760
      %1741 = vmatprep.subr.mxu0 %v1740
      %v1742 = vand.u32 %v935, 4294901760
      %1743 = vmatpush1.msra.mxu0 %v1742
      %v1744 = vand.u32 %v938, 4294901760
      %1745 = vmatprep.subr.mxu0 %v1744
      %v1746 = vand.u32 %v937, 4294901760
      %1747 = vmatpush1.msra.mxu0 %v1746
      %v1748 = vand.u32 %v940, 4294901760
      %1749 = vmatprep.subr.mxu0 %v1748
      %v1750 = vand.u32 %v939, 4294901760
      %1751 = vmatpush1.msra.mxu0 %v1750
      %v1752 = vand.u32 %v942, 4294901760
      %1753 = vmatprep.subr.mxu0 %v1752
      %v1754 = vand.u32 %v941, 4294901760
      %1755 = vmatpush1.msra.mxu0 %v1754
      %v1756 = vand.u32 %v944, 4294901760
      %1757 = vmatprep.subr.mxu0 %v1756
      %v1758 = vand.u32 %v943, 4294901760
      %1759 = vmatpush1.msra.mxu0 %v1758
      %v1760 = vand.u32 %v946, 4294901760
      %1761 = vmatprep.subr.mxu0 %v1760
      %v1762 = vand.u32 %v945, 4294901760
      %1763 = vmatpush1.msra.mxu0 %v1762
      %v1764 = vand.u32 %v948, 4294901760
      %1765 = vmatprep.subr.mxu0 %v1764
      %v1766 = vand.u32 %v947, 4294901760
      %1767 = vmatpush1.msra.mxu0 %v1766
      %v1768 = vand.u32 %v950, 4294901760
      %1769 = vmatprep.subr.mxu0 %v1768
      %v1770 = vand.u32 %v949, 4294901760
      %1771 = vmatpush1.msra.mxu0 %v1770
      %v1772 = vand.u32 %v952, 4294901760
      %1773 = vmatprep.subr.mxu0 %v1772
      %v1774 = vand.u32 %v951, 4294901760
      %1775 = vmatpush1.msra.mxu0 %v1774
      %v1776 = vand.u32 %v954, 4294901760
      %1777 = vmatprep.subr.mxu0 %v1776
      %v1778 = vand.u32 %v953, 4294901760
      %1779 = vmatpush1.msra.mxu0 %v1778
      %v1780 = vand.u32 %v956, 4294901760
      %1781 = vmatprep.subr.mxu0 %v1780
      %v1782 = vand.u32 %v955, 4294901760
      %1783 = vmatpush1.msra.mxu0 %v1782
      %1784 = vmatprep.subr.mxu0 0.0
      %1785 = vmatpush1.msra.mxu0 0.0
      %1786 = vmatprep.subr.mxu0 0.0
      %1787 = vmatpush1.msra.mxu0 0.0
      %1788 = vmatprep.subr.mxu0 0.0
      %1789 = vmatpush1.msra.mxu0 0.0
      %1790 = vmatprep.subr.mxu0 0.0
      %1791 = vmatpush1.msra.mxu0 0.0
      %1792 = vmatprep.subr.mxu0 0.0
      %1793 = vmatpush1.msra.mxu0 0.0
      %1794 = vmatprep.subr.mxu0 0.0
      %1795 = vmatpush1.msra.mxu0 0.0
      %1796 = vmatprep.subr.mxu0 0.0
      %1797 = vmatpush1.msra.mxu0 0.0
      %1798 = vmatprep.subr.mxu0 0.0
      %1799 = vmatpush1.msra.mxu0 0.0
      %1800 = vmatprep.subr.mxu0 0.0
      %1801 = vmatpush1.msra.mxu0 0.0
      %1802 = vmatprep.subr.mxu0 0.0
      %1803 = vmatpush1.msra.mxu0 0.0
      %1804 = vmatprep.subr.mxu0 0.0
      %1805 = vmatpush1.msra.mxu0 0.0
      %1806 = vmatprep.subr.mxu0 0.0
      %1807 = vmatpush1.msra.mxu0 0.0
      %1808 = vmatprep.subr.mxu0 0.0
      %1809 = vmatpush1.msra.mxu0 0.0
      %1810 = vmatprep.subr.mxu0 0.0
      %1811 = vmatpush1.msra.mxu0 0.0
      %1812 = vmatprep.subr.mxu0 0.0
      %1813 = vmatpush1.msra.mxu0 0.0
      %1814 = vmatprep.subr.mxu0 0.0
      %1815 = vmatpush1.msra.mxu0 0.0
      %1816 = vmatprep.mubr.f32.mxu0 0.0
      %v1817 = vand.u32 %v260, 4294901760
      %1818 = vmatmul.mubr.f32.gmra.mrb[0].mxu0 %v1817
      %v1819 = vpop.f32.mrb[0].mxu0
      %v1820 = vadd.f32 %v1716, %v1819
      %v1821 = vpop.f32.mrb[0].mxu0
      %v1822 = vadd.f32 %v1718, %v1821
      %1823 = vdwg.mxu0
      %v1824 = vtanh.pop %v922
      %vm1825 = vcmask 785408
      %1826 = vst.msk [vmem:[%s254] sm:$0xff] %vm1825, %v1824
      %v1827 = vmax.f32 %v1820, 0.0
      %v1828 = vmax.f32 %v1822, 0.0
      %1829 = vst [vmem:[%s259] sm:$0xff] %v1827
      %vm1830 = vcmask 130048
      %1831 = vst.msk [vmem:[%s259 + $0x8] sm:$0xff] %vm1830, %v1828
      %p1832 = scmp.lt.s32.totalorder %s18, 2
      %s1833 = scalar_select %p1832, %s18, 2
      %s1834 = smul.addr %s1833, 8
      %s1835 = scalar_lea.vmem %s5, %s1834
      %p1836 = scmp.lt.s32.totalorder %s18, 2
      %s1837 = scalar_select %p1836, %s18, 2
      %s1838 = smul.addr %s1837, 2
      %s1839 = smul.addr %s1838, 8
      %s1840 = scalar_lea.vmem %s6, %s1839
      // Predicated region
      $region41: #{extract_ssr_params.1} parent=39 // pred_check
        %p1841 = pneg %p146
      $region42: #{extract_ssr_params.1} parent=39 // pred_check_branch
        %1843 = sbr.rel (%p1841) target = $region44
      $region43: #{extract_ssr_params.1} parent=39 // pred_region
        _
      $region44: #{extract_ssr_params.1} parent=39 // pred_fallthru
        _
      // Predicated region
      $region45: #{extract_ssr_params.1} parent=39 // pred_check
        %p1844 = pneg %p172
      $region46: #{extract_ssr_params.1} parent=39 // pred_check_branch
        %1846 = sbr.rel (%p1844) target = $region48
      $region47: #{extract_ssr_params.1} parent=39 // pred_region
        _
      $region48: #{extract_ssr_params.1} parent=39 // pred_fallthru
        _
    $region40: #{extract_ssr_params.1} parent=5 // pred_fallthru
      _
    %p1847 = scmp.le.s32.totalorder 2, %s13
    // Predicated region
    $region49: #{extract_ssr_params.1} parent=5 // pred_check
      %p1848 = pneg %p1847
    $region50: #{extract_ssr_params.1} parent=5 // pred_check_branch
      %1850 = sbr.rel (%p1848) target = $region52
    $region51: #{extract_ssr_params.1} parent=5 // pred_region
      %s1851 = ssub.s32 %s13, 2
      // Predicated region
      $region53: #{extract_ssr_params.1} parent=51 // pred_check
        %p1852 = pneg %p152
      $region54: #{extract_ssr_params.1} parent=51 // pred_check_branch
        %1854 = sbr.rel (%p1852) target = $region56
      $region55: #{extract_ssr_params.1} parent=51 // pred_region
        %p1855 = scmp.lt.s32.totalorder %s19, 2
        %s1856 = scalar_select %p1855, %s19, 2
        %s1857 = smul.addr %s1856, 8
        %s1858 = scalar_lea.vmem %s5, %s1857
      $region56: #{extract_ssr_params.1} parent=51 // pred_fallthru
        _
      // Predicated region
      $region57: #{extract_ssr_params.1} parent=51 // pred_check
        %p1859 = pneg %p178
      $region58: #{extract_ssr_params.1} parent=51 // pred_check_branch
        %1861 = sbr.rel (%p1859) target = $region60
      $region59: #{extract_ssr_params.1} parent=51 // pred_region
        %p1862 = scmp.lt.s32.totalorder %s19, 2
        %s1863 = scalar_select %p1862, %s19, 2
        %s1864 = smul.addr %s1863, 2
        %s1865 = smul.addr %s1864, 8
        %s1866 = scalar_lea.vmem %s6, %s1865
      $region60: #{extract_ssr_params.1} parent=51 // pred_fallthru
        _
    $region52: #{extract_ssr_params.1} parent=5 // pred_fallthru
      _
  $region6: #{extract_ssr_params.1} parent=0 // loop_footer
    %s17 = sadd.s32 1, %s13
  $region7: #{extract_ssr_params.1} parent=0 // loop_footer_branch
    %12 = sbr.rel target = $region3
  $region8: #{extract_ssr_params.1} parent=0 // loop_exit
    _

</llo_original>
